<compile_context>
chip_gen: v6e
topology: v6e:2x2x1
jax: 0.10.0
libtpu: 0.0.40
codegen_flags: <defaults>
</compile_context>

<pallas_src>
import math
import functools

import numpy as np
import jax
import jax.numpy as jnp
from jax.experimental import pallas as pl
from jax.experimental.pallas import tpu as pltpu


def _block_kernel(x_ref, bias_ref,
                  g1_ref, b1_ref, g2_ref, b2_ref,
                  wqkv_ref, bqkv_ref, wp_ref, bp_ref,
                  w1_ref, bb1_ref, w2_ref, bb2_ref,
                  o_ref,
                  y_scratch,
                  *, n_head: int):
    T, C = x_ref.shape
    hs = C // n_head
    scale = 1.0 / math.sqrt(hs)

    x = x_ref[...].astype(jnp.float32)          # residual stream stays f32

    # ---- LayerNorm 1 (eps = 1e-5, PyTorch default) ----
    mu = jnp.mean(x, axis=-1, keepdims=True)
    var = jnp.mean((x - mu) ** 2, axis=-1, keepdims=True)
    xn = (x - mu) * jax.lax.rsqrt(var + 1e-5)
    xn = xn * g1_ref[...] + b1_ref[...]
    xn_bf = xn.astype(jnp.bfloat16)             # bf16 operands -> full-rate MXU

    # ---- fused QKV projection: one (T,C)@(C,3C) matmul ----
    qkv = jnp.dot(xn_bf, wqkv_ref[...],
                  preferred_element_type=jnp.float32) + bqkv_ref[...]
    q_bf = (qkv[:, :C] * scale).astype(jnp.bfloat16)   # fold 1/sqrt(hs) into q
    k_bf = qkv[:, C:2 * C].astype(jnp.bfloat16)
    v_bf = qkv[:, 2 * C:].astype(jnp.bfloat16)

    # additive 0 / -1e30 cross-conditional causal bias, precomputed in wrapper.
    # (Every row keeps its diagonal unmasked, so -1e30 never yields a fully
    # masked row.)
    bias = bias_ref[...]                         # (T, T) f32

    # ---- per-head attention; head outputs land in a (T, C) bf16 scratch ----
    # TODO(synk): for large n_head use a head-batched dot_general or a bounded
    # lax.fori_loop instead of a full static unroll.
    for h in range(n_head):                      # static unroll (n_head small)
        sl = slice(h * hs, (h + 1) * hs)
        # scores: contract last dims of q and k (no explicit transpose).
        s = jax.lax.dot_general(
            q_bf[:, sl], k_bf[:, sl],
            dimension_numbers=(((1,), (1,)), ((), ())),
            preferred_element_type=jnp.float32) + bias          # (T, T)
        m = jnp.max(s, axis=-1, keepdims=True)
        p = jnp.exp(s - m)                                      # unnormalized probs
        denom = jnp.sum(p, axis=-1, keepdims=True)
        yh = jnp.dot(p.astype(jnp.bfloat16), v_bf[:, sl],
                     preferred_element_type=jnp.float32)        # (T, hs)
        yh = yh * pl.reciprocal(denom, approx=True)             # deferred softmax norm (EUP)
        y_scratch[:, sl] = yh.astype(jnp.bfloat16)

    # ---- single full-K output projection (T,C)@(C,C) ----
    attn = jnp.dot(y_scratch[...], wp_ref[...],
                   preferred_element_type=jnp.float32) + bp_ref[...]

    # residual 1 (attn_drop / resid_drop are identity in eval mode)
    x = x + attn

    # ---- LayerNorm 2 + MLP ----
    mu2 = jnp.mean(x, axis=-1, keepdims=True)
    var2 = jnp.mean((x - mu2) ** 2, axis=-1, keepdims=True)
    x2 = (x - mu2) * jax.lax.rsqrt(var2 + 1e-5)
    x2 = x2 * g2_ref[...] + b2_ref[...]

    h1 = jnp.dot(x2.astype(jnp.bfloat16), w1_ref[...],
                 preferred_element_type=jnp.float32) + bb1_ref[...]
    # exact (erf-based) GELU to match torch.nn.GELU default semantics.
    # TODO(synk): tanh-approx GELU would move this to the EUP if tolerance allows.
    h1 = 0.5 * h1 * (1.0 + jax.lax.erf(h1 * (1.0 / math.sqrt(2.0))))
    h2 = jnp.dot(h1.astype(jnp.bfloat16), w2_ref[...],
                 preferred_element_type=jnp.float32) + bb2_ref[...]

    o_ref[...] = (x + h2).astype(o_ref.dtype)    # residual 2 (Dropout = identity)


def _mask_bias(T):
    """Cross-conditional causal mask as an additive bias, built once (numpy)."""
    t = T // 2
    row = np.arange(T)[:, None]
    col = np.arange(T)[None, :]
    allowed = (row % t) >= (col % t)             # tril(t,t) tiled 2x2 over (T,T)
    return jnp.asarray(np.where(allowed, 0.0, -1e30).astype(np.float32))


def prepare_block_params(params):
    """One-time conversion of f32 PyTorch-style params to kernel-ready params:
    fuse wq|wk|wv -> (C,3C), cast matmul weights to bf16."""
    (g1, b1, g2, b2, wq, bq, wk, bk, wv, bv, wp, bp, w1, bb1, w2, bb2) = params
    wqkv = jnp.concatenate([wq, wk, wv], axis=1).astype(jnp.bfloat16)   # (C, 3C)
    bqkv = jnp.concatenate([bq, bk, bv], axis=1).astype(jnp.float32)    # (1, 3C)
    return [g1, b1, g2, b2,
            wqkv, bqkv,
            wp.astype(jnp.bfloat16), bp,
            w1.astype(jnp.bfloat16), bb1,
            w2.astype(jnp.bfloat16), bb2]


def transformer_block(x, kparams, n_head, *, vmem_limit_bytes=None):
    """kparams from prepare_block_params:
    [g1,b1,g2,b2, wqkv,bqkv, wp,bp, w1,bb1, w2,bb2] (weights bf16, rest f32)."""
    B, T, C = x.shape
    assert C % n_head == 0 and T % 2 == 0

    bias = _mask_bias(T)                         # (T, T) f32, resident input

    def full_spec(p):
        nd = p.ndim
        return pl.BlockSpec(p.shape, lambda b, _nd=nd: (0,) * _nd)

    in_specs = [pl.BlockSpec((None, T, C), lambda b: (b, 0, 0)),   # x block per batch
                full_spec(bias)]
    in_specs += [full_spec(p) for p in kparams]

    if vmem_limit_bytes is None:
        # resident inputs (assume double-buffered) + out block + scratch +
        # transient activations / score buffers, 25% headroom.
        in_bytes = sum(int(np.prod(p.shape)) * p.dtype.itemsize for p in kparams)
        in_bytes += bias.size * 4 + T * C * x.dtype.itemsize       # + x block
        out_bytes = T * C * x.dtype.itemsize
        scratch_bytes = T * C * 2                                   # bf16 y_scratch
        transient = 4 * (T * 3 * C * 4) + 2 * (T * T * 4) + 2 * (T * 4 * C * 4)
        vmem_limit_bytes = int(1.25 * (2 * (in_bytes + out_bytes)
                                       + scratch_bytes + transient))
        vmem_limit_bytes = max(32 * 1024 * 1024,
                               min(vmem_limit_bytes, 100 * 1024 * 1024))

    # Batch programs are independent -> "parallel" lets multi-TC chips shard them.
    # TODO(synk): for large T (or v7x's 64 MiB VMEM), tile queries flash-style
    # (grid=(B, T//tq) with online-softmax scratch, both axes "parallel") and
    # single-buffer the constant-index weight blocks.
    kernel = functools.partial(_block_kernel, n_head=n_head)
    return pl.pallas_call(
        kernel,
        out_shape=jax.ShapeDtypeStruct((B, T, C), x.dtype),
        grid_spec=pltpu.PrefetchScalarGridSpec(
            num_scalar_prefetch=0,
            grid=(B,),
            in_specs=in_specs,
            out_specs=pl.BlockSpec((None, T, C), lambda b: (b, 0, 0)),
            scratch_shapes=[pltpu.VMEM((T, C), jnp.bfloat16)],
        ),
        compiler_params=pltpu.CompilerParams(
            dimension_semantics=("parallel",),
            vmem_limit_bytes=vmem_limit_bytes),
    )(x, bias, *kparams)


def reference_block(x, p, n_head):
    """Pure-JAX f32 reference mirroring the PyTorch forward (eval mode)."""
    B, T, C = x.shape
    hs = C // n_head
    t = T // 2

    def ln(z, g, b):
        mu = jnp.mean(z, -1, keepdims=True)
        var = jnp.mean((z - mu) ** 2, -1, keepdims=True)
        return (z - mu) / jnp.sqrt(var + 1e-5) * g + b

    (g1, b1, g2, b2, wq, bq, wk, bk, wv, bv, wp, bp, w1, bb1, w2, bb2) = p
    xn = ln(x, g1, b1)
    q = (xn @ wq + bq).reshape(B, T, n_head, hs).transpose(0, 2, 1, 3)
    k = (xn @ wk + bk).reshape(B, T, n_head, hs).transpose(0, 2, 1, 3)
    v = (xn @ wv + bv).reshape(B, T, n_head, hs).transpose(0, 2, 1, 3)
    att = (q @ k.transpose(0, 1, 3, 2)) * (1.0 / math.sqrt(hs))
    row = jnp.arange(T)[:, None]
    col = jnp.arange(T)[None, :]
    allowed = (row % t) >= (col % t)
    att = jnp.where(allowed, att, -jnp.inf)
    att = jax.nn.softmax(att, axis=-1)
    y = (att @ v).transpose(0, 2, 1, 3).reshape(B, T, C)
    y = y @ wp + bp
    x = x + y
    x2 = ln(x, g2, b2)
    h = x2 @ w1 + bb1
    h = 0.5 * h * (1.0 + jax.scipy.special.erf(h / math.sqrt(2.0)))
    return x + (h @ w2 + bb2)


def make_params(key, C):
    ks = jax.random.split(key, 12)
    s = 0.02
    g1 = 1.0 + 0.1 * jax.random.normal(ks[0], (1, C), jnp.float32)
    b1 = 0.1 * jax.random.normal(ks[1], (1, C), jnp.float32)
    g2 = 1.0 + 0.1 * jax.random.normal(ks[2], (1, C), jnp.float32)
    b2 = 0.1 * jax.random.normal(ks[3], (1, C), jnp.float32)
    wq = s * jax.random.normal(ks[4], (C, C), jnp.float32)
    wk = s * jax.random.normal(ks[5], (C, C), jnp.float32)
    wv = s * jax.random.normal(ks[6], (C, C), jnp.float32)
    wp = s * jax.random.normal(ks[7], (C, C), jnp.float32)
    bq = s * jax.random.normal(ks[8], (1, C), jnp.float32)
    bk = jnp.zeros((1, C), jnp.float32)
    bv = jnp.zeros((1, C), jnp.float32)
    bp = s * jax.random.normal(ks[9], (1, C), jnp.float32)
    w1 = s * jax.random.normal(ks[10], (C, 4 * C), jnp.float32)
    bb1 = jnp.zeros((1, 4 * C), jnp.float32)
    w2 = s * jax.random.normal(ks[11], (4 * C, C), jnp.float32)
    bb2 = jnp.zeros((1, C), jnp.float32)
    return [g1, b1, g2, b2, wq, bq, wk, bk, wv, bv, wp, bp, w1, bb1, w2, bb2]


if __name__ == "__main__":
    # T must be even (T = 2t), C % n_head == 0; lane-dense small demo shapes.
    B, T, C, n_head = 2, 16, 128, 4
    key = jax.random.PRNGKey(0)
    kx, kp = jax.random.split(key)
    x = jax.random.normal(kx, (B, T, C), jnp.float32)
    params = make_params(kp, C)

    kparams = prepare_block_params(params)       # one-time bf16 cast / QKV fuse
    out = transformer_block(x, kparams, n_head)
    out = jax.block_until_ready(out)

    ref = reference_block(x, params, n_head)
    assert out.shape == (B, T, C)
    # bf16-matmul kernel vs. f32 reference: allow bf16-level tolerance.
    assert bool(jnp.allclose(out, ref, atol=1e-2, rtol=1e-2)), "mismatch vs reference"
    print("KERNEL_OK")
</pallas_src>

<mosaic_0001>
module attributes {stable_mosaic.version = 11 : i64} {
  func.func @_block_kernel(%arg0: i32, %arg1: memref<1x16x128xf32, #tpu.memory_space<vmem>>, %arg2: memref<16x16xf32, #tpu.memory_space<vmem>>, %arg3: memref<1x128xf32, #tpu.memory_space<vmem>>, %arg4: memref<1x128xf32, #tpu.memory_space<vmem>>, %arg5: memref<1x128xf32, #tpu.memory_space<vmem>>, %arg6: memref<1x128xf32, #tpu.memory_space<vmem>>, %arg7: memref<128x384xbf16, #tpu.memory_space<vmem>>, %arg8: memref<1x384xf32, #tpu.memory_space<vmem>>, %arg9: memref<128x128xbf16, #tpu.memory_space<vmem>>, %arg10: memref<1x128xf32, #tpu.memory_space<vmem>>, %arg11: memref<128x512xbf16, #tpu.memory_space<vmem>>, %arg12: memref<1x512xf32, #tpu.memory_space<vmem>>, %arg13: memref<512x128xbf16, #tpu.memory_space<vmem>>, %arg14: memref<1x128xf32, #tpu.memory_space<vmem>>, %arg15: memref<1x16x128xf32, #tpu.memory_space<vmem>>, %arg16: memref<16x128xbf16, #tpu.memory_space<vmem>>) attributes {dimension_semantics = [#tpu.dimension_semantics<parallel>], iteration_bounds = array<i64: 2>, scalar_prefetch = 0 : i64, scratch_operands = 1 : i64, tpu.core_type = #tpu.core_type<tc>, window_params = [{transform_indices = @transform_0, window_bounds = array<i64: 1, 16, 128>}, {pipeline_mode = #tpu.pipeline_mode<synchronous>, transform_indices = @transform_1, window_bounds = array<i64: 16, 16>}, {pipeline_mode = #tpu.pipeline_mode<synchronous>, transform_indices = @transform_2, window_bounds = array<i64: 1, 128>}, {pipeline_mode = #tpu.pipeline_mode<synchronous>, transform_indices = @transform_3, window_bounds = array<i64: 1, 128>}, {pipeline_mode = #tpu.pipeline_mode<synchronous>, transform_indices = @transform_4, window_bounds = array<i64: 1, 128>}, {pipeline_mode = #tpu.pipeline_mode<synchronous>, transform_indices = @transform_5, window_bounds = array<i64: 1, 128>}, {pipeline_mode = #tpu.pipeline_mode<synchronous>, transform_indices = @transform_6, window_bounds = array<i64: 128, 384>}, {pipeline_mode = #tpu.pipeline_mode<synchronous>, transform_indices = @transform_7, window_bounds = array<i64: 1, 384>}, {pipeline_mode = #tpu.pipeline_mode<synchronous>, transform_indices = @transform_8, window_bounds = array<i64: 128, 128>}, {pipeline_mode = #tpu.pipeline_mode<synchronous>, transform_indices = @transform_9, window_bounds = array<i64: 1, 128>}, {pipeline_mode = #tpu.pipeline_mode<synchronous>, transform_indices = @transform_10, window_bounds = array<i64: 128, 512>}, {pipeline_mode = #tpu.pipeline_mode<synchronous>, transform_indices = @transform_11, window_bounds = array<i64: 1, 512>}, {pipeline_mode = #tpu.pipeline_mode<synchronous>, transform_indices = @transform_12, window_bounds = array<i64: 512, 128>}, {pipeline_mode = #tpu.pipeline_mode<synchronous>, transform_indices = @transform_13, window_bounds = array<i64: 1, 128>}, {transform_indices = @transform_14, window_bounds = array<i64: 1, 16, 128>}]} {
    %c0 = arith.constant 0 : index
    %c0_0 = arith.constant 0 : index
    %c0_1 = arith.constant 0 : index
    %0 = vector.load %arg1[%c0, %c0_0, %c0_1] : memref<1x16x128xf32, #tpu.memory_space<vmem>>, vector<1x16x128xf32>
    %1 = vector.shape_cast %0 : vector<1x16x128xf32> to vector<16x128xf32>
    %cst = arith.constant dense<0.000000e+00> : vector<16xf32>
    %2 = vector.multi_reduction <add>, %1, %cst [1] : vector<16x128xf32> to vector<16xf32>
    %3 = vector.shape_cast %2 : vector<16xf32> to vector<16x1xf32>
    %cst_2 = arith.constant 1.280000e+02 : f32
    %4 = vector.broadcast %cst_2 : f32 to vector<16x1xf32>
    %5 = arith.divf %3, %4 : vector<16x1xf32>
    %6 = vector.broadcast %5 : vector<16x1xf32> to vector<16x128xf32>
    %7 = arith.subf %1, %6 : vector<16x128xf32>
    %8 = arith.mulf %7, %7 : vector<16x128xf32>
    %cst_3 = arith.constant dense<0.000000e+00> : vector<16xf32>
    %9 = vector.multi_reduction <add>, %8, %cst_3 [1] : vector<16x128xf32> to vector<16xf32>
    %10 = vector.shape_cast %9 : vector<16xf32> to vector<16x1xf32>
    %cst_4 = arith.constant 1.280000e+02 : f32
    %11 = vector.broadcast %cst_4 : f32 to vector<16x1xf32>
    %12 = arith.divf %10, %11 : vector<16x1xf32>
    %13 = vector.broadcast %5 : vector<16x1xf32> to vector<16x128xf32>
    %14 = arith.subf %1, %13 : vector<16x128xf32>
    %cst_5 = arith.constant 9.99999974E-6 : f32
    %15 = vector.broadcast %cst_5 : f32 to vector<16x1xf32>
    %16 = arith.addf %12, %15 : vector<16x1xf32>
    %17 = math.rsqrt %16 : vector<16x1xf32>
    %18 = vector.broadcast %17 : vector<16x1xf32> to vector<16x128xf32>
    %19 = arith.mulf %14, %18 : vector<16x128xf32>
    %c0_6 = arith.constant 0 : index
    %c0_7 = arith.constant 0 : index
    %20 = vector.load %arg3[%c0_6, %c0_7] : memref<1x128xf32, #tpu.memory_space<vmem>>, vector<1x128xf32>
    %21 = vector.broadcast %20 : vector<1x128xf32> to vector<16x128xf32>
    %22 = arith.mulf %19, %21 : vector<16x128xf32>
    %c0_8 = arith.constant 0 : index
    %c0_9 = arith.constant 0 : index
    %23 = vector.load %arg4[%c0_8, %c0_9] : memref<1x128xf32, #tpu.memory_space<vmem>>, vector<1x128xf32>
    %24 = vector.broadcast %23 : vector<1x128xf32> to vector<16x128xf32>
    %25 = arith.addf %22, %24 : vector<16x128xf32>
    %26 = arith.truncf %25 : vector<16x128xf32> to vector<16x128xbf16>
    %c0_10 = arith.constant 0 : index
    %c0_11 = arith.constant 0 : index
    %27 = vector.load %arg7[%c0_10, %c0_11] : memref<128x384xbf16, #tpu.memory_space<vmem>>, vector<128x384xbf16>
    %cst_12 = arith.constant dense<0.000000e+00> : vector<16x384xf32>
    %28 = tpu.matmul %26, %27, %cst_12 {dimension_numbers = #tpu.dot_dimension_numbers<[1], [0], [0], [1], [0, 0, 1, 1], [], []>} : vector<16x128xbf16>, vector<128x384xbf16>, vector<16x384xf32> -> vector<16x384xf32>
    %c0_13 = arith.constant 0 : index
    %c0_14 = arith.constant 0 : index
    %29 = vector.load %arg8[%c0_13, %c0_14] : memref<1x384xf32, #tpu.memory_space<vmem>>, vector<1x384xf32>
    %30 = vector.broadcast %29 : vector<1x384xf32> to vector<16x384xf32>
    %31 = arith.addf %28, %30 : vector<16x384xf32>
    %32 = vector.extract_strided_slice %31 {offsets = [0, 0], sizes = [16, 128], strides = [1, 1]} : vector<16x384xf32> to vector<16x128xf32>
    %cst_15 = arith.constant 0.176776692 : f32
    %33 = vector.broadcast %cst_15 : f32 to vector<16x128xf32>
    %34 = arith.mulf %32, %33 : vector<16x128xf32>
    %35 = arith.truncf %34 : vector<16x128xf32> to vector<16x128xbf16>
    %36 = vector.extract_strided_slice %31 {offsets = [0, 128], sizes = [16, 128], strides = [1, 1]} : vector<16x384xf32> to vector<16x128xf32>
    %37 = arith.truncf %36 : vector<16x128xf32> to vector<16x128xbf16>
    %38 = vector.extract_strided_slice %31 {offsets = [0, 256], sizes = [16, 128], strides = [1, 1]} : vector<16x384xf32> to vector<16x128xf32>
    %39 = arith.truncf %38 : vector<16x128xf32> to vector<16x128xbf16>
    %c0_16 = arith.constant 0 : index
    %c0_17 = arith.constant 0 : index
    %40 = vector.load %arg2[%c0_16, %c0_17] : memref<16x16xf32, #tpu.memory_space<vmem>>, vector<16x16xf32>
    %41 = vector.extract_strided_slice %35 {offsets = [0, 0], sizes = [16, 32], strides = [1, 1]} : vector<16x128xbf16> to vector<16x32xbf16>
    %42 = vector.extract_strided_slice %37 {offsets = [0, 0], sizes = [16, 32], strides = [1, 1]} : vector<16x128xbf16> to vector<16x32xbf16>
    %cst_18 = arith.constant dense<0.000000e+00> : vector<16x16xf32>
    %43 = tpu.matmul %41, %42, %cst_18 {dimension_numbers = #tpu.dot_dimension_numbers<[1], [1], [0], [0], [0, 0, 1, 0], [], []>} : vector<16x32xbf16>, vector<16x32xbf16>, vector<16x16xf32> -> vector<16x16xf32>
    %44 = arith.addf %43, %40 : vector<16x16xf32>
    %cst_19 = arith.constant dense<0xFF800000> : vector<16xf32>
    %45 = vector.multi_reduction <maximumf>, %44, %cst_19 [1] : vector<16x16xf32> to vector<16xf32>
    %46 = vector.shape_cast %45 : vector<16xf32> to vector<16x1xf32>
    %47 = vector.broadcast %46 : vector<16x1xf32> to vector<16x16xf32>
    %48 = arith.subf %44, %47 : vector<16x16xf32>
    %49 = math.exp %48 : vector<16x16xf32>
    %cst_20 = arith.constant dense<0.000000e+00> : vector<16xf32>
    %50 = vector.multi_reduction <add>, %49, %cst_20 [1] : vector<16x16xf32> to vector<16xf32>
    %51 = vector.shape_cast %50 : vector<16xf32> to vector<16x1xf32>
    %52 = arith.truncf %49 : vector<16x16xf32> to vector<16x16xbf16>
    %53 = vector.extract_strided_slice %39 {offsets = [0, 0], sizes = [16, 32], strides = [1, 1]} : vector<16x128xbf16> to vector<16x32xbf16>
    %cst_21 = arith.constant dense<0.000000e+00> : vector<16x32xf32>
    %54 = tpu.matmul %52, %53, %cst_21 {dimension_numbers = #tpu.dot_dimension_numbers<[1], [0], [0], [1], [0, 0, 1, 1], [], []>} : vector<16x16xbf16>, vector<16x32xbf16>, vector<16x32xf32> -> vector<16x32xf32>
    %55 = tpu.reciprocal %51 {approx = true} : vector<16x1xf32> -> vector<16x1xf32>
    %56 = vector.broadcast %55 : vector<16x1xf32> to vector<16x32xf32>
    %57 = arith.mulf %54, %56 : vector<16x32xf32>
    %58 = arith.truncf %57 : vector<16x32xf32> to vector<16x32xbf16>
    %c0_22 = arith.constant 0 : index
    %c0_23 = arith.constant 0 : index
    %59 = vector.load %arg16[%c0_22, %c0_23] : memref<16x128xbf16, #tpu.memory_space<vmem>>, vector<16x32xbf16>
    tpu.vector_store %arg16[%c0_22, %c0_23], %58 {strides = array<i32>} : memref<16x128xbf16, #tpu.memory_space<vmem>>, vector<16x32xbf16>,
    %60 = vector.extract_strided_slice %35 {offsets = [0, 32], sizes = [16, 32], strides = [1, 1]} : vector<16x128xbf16> to vector<16x32xbf16>
    %61 = vector.extract_strided_slice %37 {offsets = [0, 32], sizes = [16, 32], strides = [1, 1]} : vector<16x128xbf16> to vector<16x32xbf16>
    %cst_24 = arith.constant dense<0.000000e+00> : vector<16x16xf32>
    %62 = tpu.matmul %60, %61, %cst_24 {dimension_numbers = #tpu.dot_dimension_numbers<[1], [1], [0], [0], [0, 0, 1, 0], [], []>} : vector<16x32xbf16>, vector<16x32xbf16>, vector<16x16xf32> -> vector<16x16xf32>
    %63 = arith.addf %62, %40 : vector<16x16xf32>
    %cst_25 = arith.constant dense<0xFF800000> : vector<16xf32>
    %64 = vector.multi_reduction <maximumf>, %63, %cst_25 [1] : vector<16x16xf32> to vector<16xf32>
    %65 = vector.shape_cast %64 : vector<16xf32> to vector<16x1xf32>
    %66 = vector.broadcast %65 : vector<16x1xf32> to vector<16x16xf32>
    %67 = arith.subf %63, %66 : vector<16x16xf32>
    %68 = math.exp %67 : vector<16x16xf32>
    %cst_26 = arith.constant dense<0.000000e+00> : vector<16xf32>
    %69 = vector.multi_reduction <add>, %68, %cst_26 [1] : vector<16x16xf32> to vector<16xf32>
    %70 = vector.shape_cast %69 : vector<16xf32> to vector<16x1xf32>
    %71 = arith.truncf %68 : vector<16x16xf32> to vector<16x16xbf16>
    %72 = vector.extract_strided_slice %39 {offsets = [0, 32], sizes = [16, 32], strides = [1, 1]} : vector<16x128xbf16> to vector<16x32xbf16>
    %cst_27 = arith.constant dense<0.000000e+00> : vector<16x32xf32>
    %73 = tpu.matmul %71, %72, %cst_27 {dimension_numbers = #tpu.dot_dimension_numbers<[1], [0], [0], [1], [0, 0, 1, 1], [], []>} : vector<16x16xbf16>, vector<16x32xbf16>, vector<16x32xf32> -> vector<16x32xf32>
    %74 = tpu.reciprocal %70 {approx = true} : vector<16x1xf32> -> vector<16x1xf32>
    %75 = vector.broadcast %74 : vector<16x1xf32> to vector<16x32xf32>
    %76 = arith.mulf %73, %75 : vector<16x32xf32>
    %77 = arith.truncf %76 : vector<16x32xf32> to vector<16x32xbf16>
    %c0_28 = arith.constant 0 : index
    %c32 = arith.constant 32 : index
    %78 = vector.load %arg16[%c0_28, %c32] : memref<16x128xbf16, #tpu.memory_space<vmem>>, vector<16x32xbf16>
    tpu.vector_store %arg16[%c0_28, %c32], %77 {strides = array<i32>} : memref<16x128xbf16, #tpu.memory_space<vmem>>, vector<16x32xbf16>,
    %79 = vector.extract_strided_slice %35 {offsets = [0, 64], sizes = [16, 32], strides = [1, 1]} : vector<16x128xbf16> to vector<16x32xbf16>
    %80 = vector.extract_strided_slice %37 {offsets = [0, 64], sizes = [16, 32], strides = [1, 1]} : vector<16x128xbf16> to vector<16x32xbf16>
    %cst_29 = arith.constant dense<0.000000e+00> : vector<16x16xf32>
    %81 = tpu.matmul %79, %80, %cst_29 {dimension_numbers = #tpu.dot_dimension_numbers<[1], [1], [0], [0], [0, 0, 1, 0], [], []>} : vector<16x32xbf16>, vector<16x32xbf16>, vector<16x16xf32> -> vector<16x16xf32>
    %82 = arith.addf %81, %40 : vector<16x16xf32>
    %cst_30 = arith.constant dense<0xFF800000> : vector<16xf32>
    %83 = vector.multi_reduction <maximumf>, %82, %cst_30 [1] : vector<16x16xf32> to vector<16xf32>
    %84 = vector.shape_cast %83 : vector<16xf32> to vector<16x1xf32>
    %85 = vector.broadcast %84 : vector<16x1xf32> to vector<16x16xf32>
    %86 = arith.subf %82, %85 : vector<16x16xf32>
    %87 = math.exp %86 : vector<16x16xf32>
    %cst_31 = arith.constant dense<0.000000e+00> : vector<16xf32>
    %88 = vector.multi_reduction <add>, %87, %cst_31 [1] : vector<16x16xf32> to vector<16xf32>
    %89 = vector.shape_cast %88 : vector<16xf32> to vector<16x1xf32>
    %90 = arith.truncf %87 : vector<16x16xf32> to vector<16x16xbf16>
    %91 = vector.extract_strided_slice %39 {offsets = [0, 64], sizes = [16, 32], strides = [1, 1]} : vector<16x128xbf16> to vector<16x32xbf16>
    %cst_32 = arith.constant dense<0.000000e+00> : vector<16x32xf32>
    %92 = tpu.matmul %90, %91, %cst_32 {dimension_numbers = #tpu.dot_dimension_numbers<[1], [0], [0], [1], [0, 0, 1, 1], [], []>} : vector<16x16xbf16>, vector<16x32xbf16>, vector<16x32xf32> -> vector<16x32xf32>
    %93 = tpu.reciprocal %89 {approx = true} : vector<16x1xf32> -> vector<16x1xf32>
    %94 = vector.broadcast %93 : vector<16x1xf32> to vector<16x32xf32>
    %95 = arith.mulf %92, %94 : vector<16x32xf32>
    %96 = arith.truncf %95 : vector<16x32xf32> to vector<16x32xbf16>
    %c0_33 = arith.constant 0 : index
    %c64 = arith.constant 64 : index
    %97 = vector.load %arg16[%c0_33, %c64] : memref<16x128xbf16, #tpu.memory_space<vmem>>, vector<16x32xbf16>
    tpu.vector_store %arg16[%c0_33, %c64], %96 {strides = array<i32>} : memref<16x128xbf16, #tpu.memory_space<vmem>>, vector<16x32xbf16>,
    %98 = vector.extract_strided_slice %35 {offsets = [0, 96], sizes = [16, 32], strides = [1, 1]} : vector<16x128xbf16> to vector<16x32xbf16>
    %99 = vector.extract_strided_slice %37 {offsets = [0, 96], sizes = [16, 32], strides = [1, 1]} : vector<16x128xbf16> to vector<16x32xbf16>
    %cst_34 = arith.constant dense<0.000000e+00> : vector<16x16xf32>
    %100 = tpu.matmul %98, %99, %cst_34 {dimension_numbers = #tpu.dot_dimension_numbers<[1], [1], [0], [0], [0, 0, 1, 0], [], []>} : vector<16x32xbf16>, vector<16x32xbf16>, vector<16x16xf32> -> vector<16x16xf32>
    %101 = arith.addf %100, %40 : vector<16x16xf32>
    %cst_35 = arith.constant dense<0xFF800000> : vector<16xf32>
    %102 = vector.multi_reduction <maximumf>, %101, %cst_35 [1] : vector<16x16xf32> to vector<16xf32>
    %103 = vector.shape_cast %102 : vector<16xf32> to vector<16x1xf32>
    %104 = vector.broadcast %103 : vector<16x1xf32> to vector<16x16xf32>
    %105 = arith.subf %101, %104 : vector<16x16xf32>
    %106 = math.exp %105 : vector<16x16xf32>
    %cst_36 = arith.constant dense<0.000000e+00> : vector<16xf32>
    %107 = vector.multi_reduction <add>, %106, %cst_36 [1] : vector<16x16xf32> to vector<16xf32>
    %108 = vector.shape_cast %107 : vector<16xf32> to vector<16x1xf32>
    %109 = arith.truncf %106 : vector<16x16xf32> to vector<16x16xbf16>
    %110 = vector.extract_strided_slice %39 {offsets = [0, 96], sizes = [16, 32], strides = [1, 1]} : vector<16x128xbf16> to vector<16x32xbf16>
    %cst_37 = arith.constant dense<0.000000e+00> : vector<16x32xf32>
    %111 = tpu.matmul %109, %110, %cst_37 {dimension_numbers = #tpu.dot_dimension_numbers<[1], [0], [0], [1], [0, 0, 1, 1], [], []>} : vector<16x16xbf16>, vector<16x32xbf16>, vector<16x32xf32> -> vector<16x32xf32>
    %112 = tpu.reciprocal %108 {approx = true} : vector<16x1xf32> -> vector<16x1xf32>
    %113 = vector.broadcast %112 : vector<16x1xf32> to vector<16x32xf32>
    %114 = arith.mulf %111, %113 : vector<16x32xf32>
    %115 = arith.truncf %114 : vector<16x32xf32> to vector<16x32xbf16>
    %c0_38 = arith.constant 0 : index
    %c96 = arith.constant 96 : index
    %116 = vector.load %arg16[%c0_38, %c96] : memref<16x128xbf16, #tpu.memory_space<vmem>>, vector<16x32xbf16>
    tpu.vector_store %arg16[%c0_38, %c96], %115 {strides = array<i32>} : memref<16x128xbf16, #tpu.memory_space<vmem>>, vector<16x32xbf16>,
    %c0_39 = arith.constant 0 : index
    %c0_40 = arith.constant 0 : index
    %117 = vector.load %arg16[%c0_39, %c0_40] : memref<16x128xbf16, #tpu.memory_space<vmem>>, vector<16x128xbf16>
    %c0_41 = arith.constant 0 : index
    %c0_42 = arith.constant 0 : index
    %118 = vector.load %arg9[%c0_41, %c0_42] : memref<128x128xbf16, #tpu.memory_space<vmem>>, vector<128x128xbf16>
    %cst_43 = arith.constant dense<0.000000e+00> : vector<16x128xf32>
    %119 = tpu.matmul %117, %118, %cst_43 {dimension_numbers = #tpu.dot_dimension_numbers<[1], [0], [0], [1], [0, 0, 1, 1], [], []>} : vector<16x128xbf16>, vector<128x128xbf16>, vector<16x128xf32> -> vector<16x128xf32>
    %c0_44 = arith.constant 0 : index
    %c0_45 = arith.constant 0 : index
    %120 = vector.load %arg10[%c0_44, %c0_45] : memref<1x128xf32, #tpu.memory_space<vmem>>, vector<1x128xf32>
    %121 = vector.broadcast %120 : vector<1x128xf32> to vector<16x128xf32>
    %122 = arith.addf %119, %121 : vector<16x128xf32>
    %123 = arith.addf %1, %122 : vector<16x128xf32>
    %cst_46 = arith.constant dense<0.000000e+00> : vector<16xf32>
    %124 = vector.multi_reduction <add>, %123, %cst_46 [1] : vector<16x128xf32> to vector<16xf32>
    %125 = vector.shape_cast %124 : vector<16xf32> to vector<16x1xf32>
    %cst_47 = arith.constant 1.280000e+02 : f32
    %126 = vector.broadcast %cst_47 : f32 to vector<16x1xf32>
    %127 = arith.divf %125, %126 : vector<16x1xf32>
    %128 = vector.broadcast %127 : vector<16x1xf32> to vector<16x128xf32>
    %129 = arith.subf %123, %128 : vector<16x128xf32>
    %130 = arith.mulf %129, %129 : vector<16x128xf32>
    %cst_48 = arith.constant dense<0.000000e+00> : vector<16xf32>
    %131 = vector.multi_reduction <add>, %130, %cst_48 [1] : vector<16x128xf32> to vector<16xf32>
    %132 = vector.shape_cast %131 : vector<16xf32> to vector<16x1xf32>
    %cst_49 = arith.constant 1.280000e+02 : f32
    %133 = vector.broadcast %cst_49 : f32 to vector<16x1xf32>
    %134 = arith.divf %132, %133 : vector<16x1xf32>
    %135 = vector.broadcast %127 : vector<16x1xf32> to vector<16x128xf32>
    %136 = arith.subf %123, %135 : vector<16x128xf32>
    %cst_50 = arith.constant 9.99999974E-6 : f32
    %137 = vector.broadcast %cst_50 : f32 to vector<16x1xf32>
    %138 = arith.addf %134, %137 : vector<16x1xf32>
    %139 = math.rsqrt %138 : vector<16x1xf32>
    %140 = vector.broadcast %139 : vector<16x1xf32> to vector<16x128xf32>
    %141 = arith.mulf %136, %140 : vector<16x128xf32>
    %c0_51 = arith.constant 0 : index
    %c0_52 = arith.constant 0 : index
    %142 = vector.load %arg5[%c0_51, %c0_52] : memref<1x128xf32, #tpu.memory_space<vmem>>, vector<1x128xf32>
    %143 = vector.broadcast %142 : vector<1x128xf32> to vector<16x128xf32>
    %144 = arith.mulf %141, %143 : vector<16x128xf32>
    %c0_53 = arith.constant 0 : index
    %c0_54 = arith.constant 0 : index
    %145 = vector.load %arg6[%c0_53, %c0_54] : memref<1x128xf32, #tpu.memory_space<vmem>>, vector<1x128xf32>
    %146 = vector.broadcast %145 : vector<1x128xf32> to vector<16x128xf32>
    %147 = arith.addf %144, %146 : vector<16x128xf32>
    %148 = arith.truncf %147 : vector<16x128xf32> to vector<16x128xbf16>
    %c0_55 = arith.constant 0 : index
    %c0_56 = arith.constant 0 : index
    %149 = vector.load %arg11[%c0_55, %c0_56] : memref<128x512xbf16, #tpu.memory_space<vmem>>, vector<128x512xbf16>
    %cst_57 = arith.constant dense<0.000000e+00> : vector<16x512xf32>
    %150 = tpu.matmul %148, %149, %cst_57 {dimension_numbers = #tpu.dot_dimension_numbers<[1], [0], [0], [1], [0, 0, 1, 1], [], []>} : vector<16x128xbf16>, vector<128x512xbf16>, vector<16x512xf32> -> vector<16x512xf32>
    %c0_58 = arith.constant 0 : index
    %c0_59 = arith.constant 0 : index
    %151 = vector.load %arg12[%c0_58, %c0_59] : memref<1x512xf32, #tpu.memory_space<vmem>>, vector<1x512xf32>
    %152 = vector.broadcast %151 : vector<1x512xf32> to vector<16x512xf32>
    %153 = arith.addf %150, %152 : vector<16x512xf32>
    %cst_60 = arith.constant 5.000000e-01 : f32
    %154 = vector.broadcast %cst_60 : f32 to vector<16x512xf32>
    %155 = arith.mulf %154, %153 : vector<16x512xf32>
    %cst_61 = arith.constant 0.707106769 : f32
    %156 = vector.broadcast %cst_61 : f32 to vector<16x512xf32>
    %157 = arith.mulf %153, %156 : vector<16x512xf32>
    %158 = math.erf %157 : vector<16x512xf32>
    %cst_62 = arith.constant 1.000000e+00 : f32
    %159 = vector.broadcast %cst_62 : f32 to vector<16x512xf32>
    %160 = arith.addf %159, %158 : vector<16x512xf32>
    %161 = arith.mulf %155, %160 : vector<16x512xf32>
    %162 = arith.truncf %161 : vector<16x512xf32> to vector<16x512xbf16>
    %c0_63 = arith.constant 0 : index
    %c0_64 = arith.constant 0 : index
    %163 = vector.load %arg13[%c0_63, %c0_64] : memref<512x128xbf16, #tpu.memory_space<vmem>>, vector<512x128xbf16>
    %cst_65 = arith.constant dense<0.000000e+00> : vector<16x128xf32>
    %164 = tpu.matmul %162, %163, %cst_65 {dimension_numbers = #tpu.dot_dimension_numbers<[1], [0], [0], [1], [0, 0, 1, 1], [], []>} : vector<16x512xbf16>, vector<512x128xbf16>, vector<16x128xf32> -> vector<16x128xf32>
    %c0_66 = arith.constant 0 : index
    %c0_67 = arith.constant 0 : index
    %165 = vector.load %arg14[%c0_66, %c0_67] : memref<1x128xf32, #tpu.memory_space<vmem>>, vector<1x128xf32>
    %166 = vector.broadcast %165 : vector<1x128xf32> to vector<16x128xf32>
    %167 = arith.addf %164, %166 : vector<16x128xf32>
    %168 = arith.addf %123, %167 : vector<16x128xf32>
    %c0_68 = arith.constant 0 : index
    %c0_69 = arith.constant 0 : index
    %c0_70 = arith.constant 0 : index
    %169 = vector.load %arg15[%c0_68, %c0_69, %c0_70] : memref<1x16x128xf32, #tpu.memory_space<vmem>>, vector<1x16x128xf32>
    %170 = vector.shape_cast %169 : vector<1x16x128xf32> to vector<16x128xf32>
    %171 = vector.shape_cast %168 : vector<16x128xf32> to vector<1x16x128xf32>
    tpu.vector_store %arg15[%c0_68, %c0_69, %c0_70], %171 {strides = array<i32>} : memref<1x16x128xf32, #tpu.memory_space<vmem>>, vector<1x16x128xf32>,
    return
  }
  func.func @transform_0(%arg0: i32) -> (i32, i32, i32) {
    %c0_i32 = arith.constant 0 : i32
    %c0_i32_0 = arith.constant 0 : i32
    %c0_i32_1 = arith.constant 0 : i32
    return %arg0, %c0_i32, %c0_i32_0 : i32, i32, i32
  }
  func.func @transform_1(%arg0: i32) -> (i32, i32) {
    %c0_i32 = arith.constant 0 : i32
    %c0_i32_0 = arith.constant 0 : i32
    %c0_i32_1 = arith.constant 0 : i32
    return %c0_i32, %c0_i32_0 : i32, i32
  }
  func.func @transform_2(%arg0: i32) -> (i32, i32) {
    %c0_i32 = arith.constant 0 : i32
    %c0_i32_0 = arith.constant 0 : i32
    %c0_i32_1 = arith.constant 0 : i32
    return %c0_i32, %c0_i32_0 : i32, i32
  }
  func.func @transform_3(%arg0: i32) -> (i32, i32) {
    %c0_i32 = arith.constant 0 : i32
    %c0_i32_0 = arith.constant 0 : i32
    %c0_i32_1 = arith.constant 0 : i32
    return %c0_i32, %c0_i32_0 : i32, i32
  }
  func.func @transform_4(%arg0: i32) -> (i32, i32) {
    %c0_i32 = arith.constant 0 : i32
    %c0_i32_0 = arith.constant 0 : i32
    %c0_i32_1 = arith.constant 0 : i32
    return %c0_i32, %c0_i32_0 : i32, i32
  }
  func.func @transform_5(%arg0: i32) -> (i32, i32) {
    %c0_i32 = arith.constant 0 : i32
    %c0_i32_0 = arith.constant 0 : i32
    %c0_i32_1 = arith.constant 0 : i32
    return %c0_i32, %c0_i32_0 : i32, i32
  }
  func.func @transform_6(%arg0: i32) -> (i32, i32) {
    %c0_i32 = arith.constant 0 : i32
    %c0_i32_0 = arith.constant 0 : i32
    %c0_i32_1 = arith.constant 0 : i32
    return %c0_i32, %c0_i32_0 : i32, i32
  }
  func.func @transform_7(%arg0: i32) -> (i32, i32) {
    %c0_i32 = arith.constant 0 : i32
    %c0_i32_0 = arith.constant 0 : i32
    %c0_i32_1 = arith.constant 0 : i32
    return %c0_i32, %c0_i32_0 : i32, i32
  }
  func.func @transform_8(%arg0: i32) -> (i32, i32) {
    %c0_i32 = arith.constant 0 : i32
    %c0_i32_0 = arith.constant 0 : i32
    %c0_i32_1 = arith.constant 0 : i32
    return %c0_i32, %c0_i32_0 : i32, i32
  }
  func.func @transform_9(%arg0: i32) -> (i32, i32) {
    %c0_i32 = arith.constant 0 : i32
    %c0_i32_0 = arith.constant 0 : i32
    %c0_i32_1 = arith.constant 0 : i32
    return %c0_i32, %c0_i32_0 : i32, i32
  }
  func.func @transform_10(%arg0: i32) -> (i32, i32) {
    %c0_i32 = arith.constant 0 : i32
    %c0_i32_0 = arith.constant 0 : i32
    %c0_i32_1 = arith.constant 0 : i32
    return %c0_i32, %c0_i32_0 : i32, i32
  }
  func.func @transform_11(%arg0: i32) -> (i32, i32) {
    %c0_i32 = arith.constant 0 : i32
    %c0_i32_0 = arith.constant 0 : i32
    %c0_i32_1 = arith.constant 0 : i32
    return %c0_i32, %c0_i32_0 : i32, i32
  }
  func.func @transform_12(%arg0: i32) -> (i32, i32) {
    %c0_i32 = arith.constant 0 : i32
    %c0_i32_0 = arith.constant 0 : i32
    %c0_i32_1 = arith.constant 0 : i32
    return %c0_i32, %c0_i32_0 : i32, i32
  }
  func.func @transform_13(%arg0: i32) -> (i32, i32) {
    %c0_i32 = arith.constant 0 : i32
    %c0_i32_0 = arith.constant 0 : i32
    %c0_i32_1 = arith.constant 0 : i32
    return %c0_i32, %c0_i32_0 : i32, i32
  }
  func.func @transform_14(%arg0: i32) -> (i32, i32, i32) {
    %c0_i32 = arith.constant 0 : i32
    %c0_i32_0 = arith.constant 0 : i32
    %c0_i32_1 = arith.constant 0 : i32
    return %arg0, %c0_i32, %c0_i32_0 : i32, i32, i32
  }
}

</mosaic_0001>

<llo_original>
// kernel: tpu_custom_call.1
$region0: #{tpu_custom_call.1}
  #allocation0 [shape = 'u32[]', space=smem, size = 0x4, offset = 0x4, fixed_abs, tag = 'smem constant byte address 0x4 - core index']
  #allocation1 [shape = 'u32[144,128]{1,0:T(1,128)}', space=vmem, size = 0x12000, scoped, tag = 'internal scratch']
  #allocation2 [shape = 'bf16[16,128]{1,0:T(8,128)(2,1)}', space=vmem, size = 0x1000, scoped, tag = 'scratch operand']
  %s0 = inlined_call_operand.hbm [shape: f32[2,16,128], index: 0, kind: input, shape index: {}]
  %s1 = inlined_call_operand.hbm [shape: f32[16,16], index: 1, kind: input, shape index: {}]
  %s2 = inlined_call_operand.hbm [shape: f32[1,128], index: 2, kind: input, shape index: {}]
  %s3 = inlined_call_operand.hbm [shape: f32[1,128], index: 3, kind: input, shape index: {}]
  %s4 = inlined_call_operand.hbm [shape: f32[1,128], index: 4, kind: input, shape index: {}]
  %s5 = inlined_call_operand.vmem [shape: f32[1,128], index: 5, kind: input, shape index: {}]
  %s6 = inlined_call_operand.hbm [shape: bf16[128,384], index: 6, kind: input, shape index: {}]
  %s7 = inlined_call_operand.vmem [shape: f32[1,384], index: 7, kind: input, shape index: {}]
  %s8 = inlined_call_operand.hbm [shape: bf16[128,128], index: 8, kind: input, shape index: {}]
  %s9 = inlined_call_operand.vmem [shape: f32[1,128], index: 9, kind: input, shape index: {}]
  %s10 = inlined_call_operand.hbm [shape: bf16[128,512], index: 10, kind: input, shape index: {}]
  %s11 = inlined_call_operand.vmem [shape: f32[1,512], index: 11, kind: input, shape index: {}]
  %s12 = inlined_call_operand.hbm [shape: bf16[512,128], index: 12, kind: input, shape index: {}]
  %s13 = inlined_call_operand.vmem [shape: f32[1,128], index: 13, kind: input, shape index: {}]
  %s14 = inlined_call_operand.hbm [shape: f32[2,16,128], index: 14, kind: output, shape index: {}]
  %s15 = sld [smem:[#allocation0]]
  $region125: #{tpu_custom_call.1} parent=0
    _
  %s17 = ssub.s32 1, %s15
  %s18 = scalar_select 0, %s17, %s15
  $region1: #{tpu_custom_call.1} parent=0
    #allocation3 [shape = 'u8[16384]{0}', space=vmem, size = 0x4000, scoped, tag = 'input window, operand 0']
    #allocation4 [shape = 's32[2]{0}', space=sflag, size = 0x8, scoped, tag = 'scoped memory for tpu_custom_call.1']
    #allocation5 [shape = 's32[2]{0}', space=sflag, size = 0x8, scoped, tag = 'scoped memory for tpu_custom_call.1']
    #allocation6 [shape = 'u8[8192]{0}', space=vmem, size = 0x2000, scoped, tag = 'input window, operand 1, single buffered']
    #allocation7 [shape = 's32[1]{0}', space=sflag, size = 0x4, scoped, tag = 'scoped memory for tpu_custom_call.1']
    #allocation8 [shape = 'u8[512]{0}', space=vmem, size = 0x400, scoped, tag = 'input window, operand 2, single buffered']
    #allocation9 [shape = 'u8[512]{0}', space=vmem, size = 0x400, scoped, tag = 'input window, operand 3, single buffered']
    #allocation10 [shape = 's32[1]{0}', space=sflag, size = 0x4, scoped, tag = 'scoped memory for tpu_custom_call.1']
    #allocation11 [shape = 'u8[512]{0}', space=vmem, size = 0x400, scoped, tag = 'input window, operand 4, single buffered']
    #allocation12 [shape = 'u8[98304]{0}', space=vmem, size = 0x18000, scoped, tag = 'input window, operand 6, single buffered']
    #allocation13 [shape = 's32[1]{0}', space=sflag, size = 0x4, scoped, tag = 'scoped memory for tpu_custom_call.1']
    #allocation14 [shape = 'u8[32768]{0}', space=vmem, size = 0x8000, scoped, tag = 'input window, operand 8, single buffered']
    #allocation15 [shape = 'u8[131072]{0}', space=vmem, size = 0x20000, scoped, tag = 'input window, operand 10, single buffered']
    #allocation16 [shape = 's32[1]{0}', space=sflag, size = 0x4, scoped, tag = 'scoped memory for tpu_custom_call.1']
    #allocation17 [shape = 'u8[131072]{0}', space=vmem, size = 0x20000, scoped, tag = 'input window, operand 12, single buffered']
    #allocation18 [shape = 'u8[16384]{0}', space=vmem, size = 0x4000, scoped, tag = 'output window, operand 0']
    %19 = vsyncpa [#allocation4], 0
    %s20 = scalar_lea.sflag [#allocation4], 1
    %21 = vsyncpa %s20, 0
    %22 = vsyncpa [#allocation7], 0
    %23 = vsyncpa [#allocation10], 0
    %24 = vsyncpa [#allocation13], 0
    %25 = vsyncpa [#allocation16], 0
    %26 = vsyncpa [#allocation5], 0
    %s27 = scalar_lea.sflag [#allocation5], 1
    %28 = vsyncpa %s27, 0
    loop: start=0, step=1, limit=4
    $region2: #{tpu_custom_call.1} parent=1 // loop_pre_header
      _
    $region3: #{tpu_custom_call.1} parent=1 // loop_header
      %s30 = sphi 0, %s34
      %p31 = scmp.ge.s32.totalorder %s30, 4
      %s40 = sphi 0, %s42
      %s43 = sphi 0, %s40
      %s44 = sphi 0, %s43
      %s60 = sphi 0, %s44
      %s64 = sphi 0, %s64
      %s66 = sphi 0, %s64
      %s67 = sphi 0, %s66
      %s81 = sphi 0, %s67
      %s85 = sphi 0, %s85
      %s87 = sphi 0, %s85
      %s88 = sphi 0, %s87
      %s102 = sphi 0, %s88
      %s106 = sphi 0, %s106
      %s108 = sphi 0, %s106
      %s109 = sphi 0, %s108
      %s123 = sphi 0, %s109
      %s127 = sphi 0, %s127
      %s129 = sphi 0, %s127
      %s130 = sphi 0, %s129
      %s144 = sphi 0, %s130
      %s148 = sphi 0, %s148
      %s150 = sphi 0, %s148
      %s151 = sphi 0, %s150
      %s165 = sphi 0, %s151
      %s169 = sphi 0, %s169
      %s171 = sphi 0, %s169
      %s172 = sphi 0, %s171
      %s186 = sphi 0, %s172
      %s190 = sphi 0, %s190
      %s192 = sphi 0, %s190
      %s193 = sphi 0, %s192
      %s207 = sphi 0, %s193
      %s211 = sphi 0, %s211
      %s213 = sphi 0, %s211
      %s214 = sphi 0, %s213
      %s228 = sphi 0, %s214
      %s232 = sphi 0, %s232
      %s234 = sphi 0, %s232
      %s235 = sphi 0, %s234
      %s249 = sphi 0, %s235
      %s253 = sphi 0, %s253
      %s255 = sphi 0, %s253
      %s256 = sphi 0, %s255
      %s270 = sphi 0, %s256
      %s274 = sphi 0, %s274
      %s276 = sphi 0, %s274
      %s277 = sphi 0, %s276
      %s291 = sphi 0, %s277
      %s295 = sphi 0, %s295
      %s297 = sphi 0, %s295
      %s298 = sphi 0, %s297
      %s312 = sphi 0, %s298
      %s316 = sphi 0, %s316
      %s318 = sphi 0, %s316
      %s319 = sphi 0, %s318
      %s333 = sphi 0, %s319
      %s339 = sphi 0, %s341
      %s342 = sphi 0, %s339
      %s343 = sphi 0, %s342
      %s359 = sphi 0, %s343
    $region4: #{tpu_custom_call.1} parent=1 // loop_header_branch
      %33 = sbr.rel (%p31) target = $region8
    $region5: #{tpu_custom_call.1} parent=1 // loop_body
      %s35 = ssub.s32 %s30, 1
      %s36 = ssub.s32 %s30, 2
      %s37 = sadd.s32 %s30, 1
      %s38 = ssub.s32 %s30, %s37
      %p39 = scmp.eq.s32.totalorder %s38, 0
      %s41 = sadd.s32 %s40, 1
      %s42 = scalar_select %p39, %s40, %s41
      %p45 = pneg %p39
      %p46 = scmp.eq.s32.totalorder %s30, 1
      %p47 = por %p45, %p46
      %p48 = scmp.ne.s32.totalorder %s40, %s43
      %p49 = scmp.eq.s32.totalorder %s30, 0
      %p50 = por %p48, %p49
      %p51 = scmp.ne.s32.totalorder %s40, %s43
      %p52 = scmp.eq.s32.totalorder %s35, 1
      %p53 = por %p51, %p52
      %p54 = scmp.ne.s32.totalorder %s43, %s44
      %p55 = scmp.eq.s32.totalorder %s35, 0
      %p56 = por %p54, %p55
      %p57 = scmp.ne.s32.totalorder %s43, %s44
      %p58 = scmp.eq.s32.totalorder %s36, 1
      %p59 = por %p57, %p58
      %p61 = scmp.ne.s32.totalorder %s44, %s60
      %p62 = scmp.eq.s32.totalorder %s36, 0
      %p63 = por %p61, %p62
      %s65 = sadd.s32 %s64, 1
      %p68 = scmp.eq.s32.totalorder %s30, 1
      %p69 = scmp.ne.s32.totalorder %s64, %s66
      %p70 = scmp.eq.s32.totalorder %s30, 0
      %p71 = por %p69, %p70
      %p72 = scmp.ne.s32.totalorder %s64, %s66
      %p73 = scmp.eq.s32.totalorder %s35, 1
      %p74 = por %p72, %p73
      %p75 = scmp.ne.s32.totalorder %s66, %s67
      %p76 = scmp.eq.s32.totalorder %s35, 0
      %p77 = por %p75, %p76
      %p78 = scmp.ne.s32.totalorder %s66, %s67
      %p79 = scmp.eq.s32.totalorder %s36, 1
      %p80 = por %p78, %p79
      %p82 = scmp.ne.s32.totalorder %s67, %s81
      %p83 = scmp.eq.s32.totalorder %s36, 0
      %p84 = por %p82, %p83
      %s86 = sadd.s32 %s85, 1
      %p89 = scmp.eq.s32.totalorder %s30, 1
      %p90 = scmp.ne.s32.totalorder %s85, %s87
      %p91 = scmp.eq.s32.totalorder %s30, 0
      %p92 = por %p90, %p91
      %p93 = scmp.ne.s32.totalorder %s85, %s87
      %p94 = scmp.eq.s32.totalorder %s35, 1
      %p95 = por %p93, %p94
      %p96 = scmp.ne.s32.totalorder %s87, %s88
      %p97 = scmp.eq.s32.totalorder %s35, 0
      %p98 = por %p96, %p97
      %p99 = scmp.ne.s32.totalorder %s87, %s88
      %p100 = scmp.eq.s32.totalorder %s36, 1
      %p101 = por %p99, %p100
      %p103 = scmp.ne.s32.totalorder %s88, %s102
      %p104 = scmp.eq.s32.totalorder %s36, 0
      %p105 = por %p103, %p104
      %s107 = sadd.s32 %s106, 1
      %p110 = scmp.eq.s32.totalorder %s30, 1
      %p111 = scmp.ne.s32.totalorder %s106, %s108
      %p112 = scmp.eq.s32.totalorder %s30, 0
      %p113 = por %p111, %p112
      %p114 = scmp.ne.s32.totalorder %s106, %s108
      %p115 = scmp.eq.s32.totalorder %s35, 1
      %p116 = por %p114, %p115
      %p117 = scmp.ne.s32.totalorder %s108, %s109
      %p118 = scmp.eq.s32.totalorder %s35, 0
      %p119 = por %p117, %p118
      %p120 = scmp.ne.s32.totalorder %s108, %s109
      %p121 = scmp.eq.s32.totalorder %s36, 1
      %p122 = por %p120, %p121
      %p124 = scmp.ne.s32.totalorder %s109, %s123
      %p125 = scmp.eq.s32.totalorder %s36, 0
      %p126 = por %p124, %p125
      %s128 = sadd.s32 %s127, 1
      %p131 = scmp.eq.s32.totalorder %s30, 1
      %p132 = scmp.ne.s32.totalorder %s127, %s129
      %p133 = scmp.eq.s32.totalorder %s30, 0
      %p134 = por %p132, %p133
      %p135 = scmp.ne.s32.totalorder %s127, %s129
      %p136 = scmp.eq.s32.totalorder %s35, 1
      %p137 = por %p135, %p136
      %p138 = scmp.ne.s32.totalorder %s129, %s130
      %p139 = scmp.eq.s32.totalorder %s35, 0
      %p140 = por %p138, %p139
      %p141 = scmp.ne.s32.totalorder %s129, %s130
      %p142 = scmp.eq.s32.totalorder %s36, 1
      %p143 = por %p141, %p142
      %p145 = scmp.ne.s32.totalorder %s130, %s144
      %p146 = scmp.eq.s32.totalorder %s36, 0
      %p147 = por %p145, %p146
      %s149 = sadd.s32 %s148, 1
      %p152 = scmp.eq.s32.totalorder %s30, 1
      %p153 = scmp.ne.s32.totalorder %s148, %s150
      %p154 = scmp.eq.s32.totalorder %s30, 0
      %p155 = por %p153, %p154
      %p156 = scmp.ne.s32.totalorder %s148, %s150
      %p157 = scmp.eq.s32.totalorder %s35, 1
      %p158 = por %p156, %p157
      %p159 = scmp.ne.s32.totalorder %s150, %s151
      %p160 = scmp.eq.s32.totalorder %s35, 0
      %p161 = por %p159, %p160
      %p162 = scmp.ne.s32.totalorder %s150, %s151
      %p163 = scmp.eq.s32.totalorder %s36, 1
      %p164 = por %p162, %p163
      %p166 = scmp.ne.s32.totalorder %s151, %s165
      %p167 = scmp.eq.s32.totalorder %s36, 0
      %p168 = por %p166, %p167
      %s170 = sadd.s32 %s169, 1
      %p173 = scmp.eq.s32.totalorder %s30, 1
      %p174 = scmp.ne.s32.totalorder %s169, %s171
      %p175 = scmp.eq.s32.totalorder %s30, 0
      %p176 = por %p174, %p175
      %p177 = scmp.ne.s32.totalorder %s169, %s171
      %p178 = scmp.eq.s32.totalorder %s35, 1
      %p179 = por %p177, %p178
      %p180 = scmp.ne.s32.totalorder %s171, %s172
      %p181 = scmp.eq.s32.totalorder %s35, 0
      %p182 = por %p180, %p181
      %p183 = scmp.ne.s32.totalorder %s171, %s172
      %p184 = scmp.eq.s32.totalorder %s36, 1
      %p185 = por %p183, %p184
      %p187 = scmp.ne.s32.totalorder %s172, %s186
      %p188 = scmp.eq.s32.totalorder %s36, 0
      %p189 = por %p187, %p188
      %s191 = sadd.s32 %s190, 1
      %p194 = scmp.eq.s32.totalorder %s30, 1
      %p195 = scmp.ne.s32.totalorder %s190, %s192
      %p196 = scmp.eq.s32.totalorder %s30, 0
      %p197 = por %p195, %p196
      %p198 = scmp.ne.s32.totalorder %s190, %s192
      %p199 = scmp.eq.s32.totalorder %s35, 1
      %p200 = por %p198, %p199
      %p201 = scmp.ne.s32.totalorder %s192, %s193
      %p202 = scmp.eq.s32.totalorder %s35, 0
      %p203 = por %p201, %p202
      %p204 = scmp.ne.s32.totalorder %s192, %s193
      %p205 = scmp.eq.s32.totalorder %s36, 1
      %p206 = por %p204, %p205
      %p208 = scmp.ne.s32.totalorder %s193, %s207
      %p209 = scmp.eq.s32.totalorder %s36, 0
      %p210 = por %p208, %p209
      %s212 = sadd.s32 %s211, 1
      %p215 = scmp.eq.s32.totalorder %s30, 1
      %p216 = scmp.ne.s32.totalorder %s211, %s213
      %p217 = scmp.eq.s32.totalorder %s30, 0
      %p218 = por %p216, %p217
      %p219 = scmp.ne.s32.totalorder %s211, %s213
      %p220 = scmp.eq.s32.totalorder %s35, 1
      %p221 = por %p219, %p220
      %p222 = scmp.ne.s32.totalorder %s213, %s214
      %p223 = scmp.eq.s32.totalorder %s35, 0
      %p224 = por %p222, %p223
      %p225 = scmp.ne.s32.totalorder %s213, %s214
      %p226 = scmp.eq.s32.totalorder %s36, 1
      %p227 = por %p225, %p226
      %p229 = scmp.ne.s32.totalorder %s214, %s228
      %p230 = scmp.eq.s32.totalorder %s36, 0
      %p231 = por %p229, %p230
      %s233 = sadd.s32 %s232, 1
      %p236 = scmp.eq.s32.totalorder %s30, 1
      %p237 = scmp.ne.s32.totalorder %s232, %s234
      %p238 = scmp.eq.s32.totalorder %s30, 0
      %p239 = por %p237, %p238
      %p240 = scmp.ne.s32.totalorder %s232, %s234
      %p241 = scmp.eq.s32.totalorder %s35, 1
      %p242 = por %p240, %p241
      %p243 = scmp.ne.s32.totalorder %s234, %s235
      %p244 = scmp.eq.s32.totalorder %s35, 0
      %p245 = por %p243, %p244
      %p246 = scmp.ne.s32.totalorder %s234, %s235
      %p247 = scmp.eq.s32.totalorder %s36, 1
      %p248 = por %p246, %p247
      %p250 = scmp.ne.s32.totalorder %s235, %s249
      %p251 = scmp.eq.s32.totalorder %s36, 0
      %p252 = por %p250, %p251
      %s254 = sadd.s32 %s253, 1
      %p257 = scmp.eq.s32.totalorder %s30, 1
      %p258 = scmp.ne.s32.totalorder %s253, %s255
      %p259 = scmp.eq.s32.totalorder %s30, 0
      %p260 = por %p258, %p259
      %p261 = scmp.ne.s32.totalorder %s253, %s255
      %p262 = scmp.eq.s32.totalorder %s35, 1
      %p263 = por %p261, %p262
      %p264 = scmp.ne.s32.totalorder %s255, %s256
      %p265 = scmp.eq.s32.totalorder %s35, 0
      %p266 = por %p264, %p265
      %p267 = scmp.ne.s32.totalorder %s255, %s256
      %p268 = scmp.eq.s32.totalorder %s36, 1
      %p269 = por %p267, %p268
      %p271 = scmp.ne.s32.totalorder %s256, %s270
      %p272 = scmp.eq.s32.totalorder %s36, 0
      %p273 = por %p271, %p272
      %s275 = sadd.s32 %s274, 1
      %p278 = scmp.eq.s32.totalorder %s30, 1
      %p279 = scmp.ne.s32.totalorder %s274, %s276
      %p280 = scmp.eq.s32.totalorder %s30, 0
      %p281 = por %p279, %p280
      %p282 = scmp.ne.s32.totalorder %s274, %s276
      %p283 = scmp.eq.s32.totalorder %s35, 1
      %p284 = por %p282, %p283
      %p285 = scmp.ne.s32.totalorder %s276, %s277
      %p286 = scmp.eq.s32.totalorder %s35, 0
      %p287 = por %p285, %p286
      %p288 = scmp.ne.s32.totalorder %s276, %s277
      %p289 = scmp.eq.s32.totalorder %s36, 1
      %p290 = por %p288, %p289
      %p292 = scmp.ne.s32.totalorder %s277, %s291
      %p293 = scmp.eq.s32.totalorder %s36, 0
      %p294 = por %p292, %p293
      %s296 = sadd.s32 %s295, 1
      %p299 = scmp.eq.s32.totalorder %s30, 1
      %p300 = scmp.ne.s32.totalorder %s295, %s297
      %p301 = scmp.eq.s32.totalorder %s30, 0
      %p302 = por %p300, %p301
      %p303 = scmp.ne.s32.totalorder %s295, %s297
      %p304 = scmp.eq.s32.totalorder %s35, 1
      %p305 = por %p303, %p304
      %p306 = scmp.ne.s32.totalorder %s297, %s298
      %p307 = scmp.eq.s32.totalorder %s35, 0
      %p308 = por %p306, %p307
      %p309 = scmp.ne.s32.totalorder %s297, %s298
      %p310 = scmp.eq.s32.totalorder %s36, 1
      %p311 = por %p309, %p310
      %p313 = scmp.ne.s32.totalorder %s298, %s312
      %p314 = scmp.eq.s32.totalorder %s36, 0
      %p315 = por %p313, %p314
      %s317 = sadd.s32 %s316, 1
      %p320 = scmp.eq.s32.totalorder %s30, 1
      %p321 = scmp.ne.s32.totalorder %s316, %s318
      %p322 = scmp.eq.s32.totalorder %s30, 0
      %p323 = por %p321, %p322
      %p324 = scmp.ne.s32.totalorder %s316, %s318
      %p325 = scmp.eq.s32.totalorder %s35, 1
      %p326 = por %p324, %p325
      %p327 = scmp.ne.s32.totalorder %s318, %s319
      %p328 = scmp.eq.s32.totalorder %s35, 0
      %p329 = por %p327, %p328
      %p330 = scmp.ne.s32.totalorder %s318, %s319
      %p331 = scmp.eq.s32.totalorder %s36, 1
      %p332 = por %p330, %p331
      %p334 = scmp.ne.s32.totalorder %s319, %s333
      %p335 = scmp.eq.s32.totalorder %s36, 0
      %p336 = por %p334, %p335
      %s337 = ssub.s32 %s30, %s37
      %p338 = scmp.eq.s32.totalorder %s337, 0
      %s340 = sadd.s32 %s339, 1
      %s341 = scalar_select %p338, %s339, %s340
      %p344 = pneg %p338
      %p345 = scmp.eq.s32.totalorder %s30, 1
      %p346 = por %p344, %p345
      %p347 = scmp.ne.s32.totalorder %s339, %s342
      %p348 = scmp.eq.s32.totalorder %s30, 0
      %p349 = por %p347, %p348
      %p350 = scmp.ne.s32.totalorder %s339, %s342
      %p351 = scmp.eq.s32.totalorder %s35, 1
      %p352 = por %p350, %p351
      %p353 = scmp.ne.s32.totalorder %s342, %s343
      %p354 = scmp.eq.s32.totalorder %s35, 0
      %p355 = por %p353, %p354
      %p356 = scmp.ne.s32.totalorder %s342, %s343
      %p357 = scmp.eq.s32.totalorder %s36, 1
      %p358 = por %p356, %p357
      %p360 = scmp.ne.s32.totalorder %s343, %s359
      %p361 = scmp.eq.s32.totalorder %s36, 0
      %p362 = por %p360, %p361
      %p363 = scmp.le.s32.totalorder 1, %s30
      %p364 = scmp.lt.s32.totalorder %s30, 3
      %p365 = pnand %p363, %p364
      %p366 = pneg %p365
      // Predicated region
      $region9: #{tpu_custom_call.1} parent=5 // pred_check
        _
      $region10: #{tpu_custom_call.1} parent=5 // pred_check_branch
        %368 = sbr.rel (%p365) target = $region12
      $region11: #{tpu_custom_call.1} parent=5 // pred_region
        %s369 = ssub.s32 %s30, 1
        // Predicated region
        $region13: #{tpu_custom_call.1} parent=11 // pred_check
          %p370 = pneg %p77
        $region14: #{tpu_custom_call.1} parent=11 // pred_check_branch
          %372 = sbr.rel (%p370) target = $region16
        $region15: #{tpu_custom_call.1} parent=11 // pred_region
          %s374 = ssub.s32 256, 256
          %375 = vsyncadd [#allocation7], %s374
          %s376 = sshll.u32 [#allocation6], 4
          %s377 = int_to_ptr.vmem [resolvable:$true] %s376
          %382 = dma.hbm_to_vmem [thread:$0]  %s1, 256, %s377, [#allocation7], 128, 128, 8
        $region16: #{tpu_custom_call.1} parent=11 // pred_fallthru
          _
        // Predicated region
        $region17: #{tpu_custom_call.1} parent=11 // pred_check
          %p383 = pneg %p98
        $region18: #{tpu_custom_call.1} parent=11 // pred_check_branch
          %385 = sbr.rel (%p383) target = $region20
        $region19: #{tpu_custom_call.1} parent=11 // pred_region
          %s387 = ssub.s32 16, 16
          %388 = vsyncadd [#allocation7], %s387
          %s390 = sshll.u32 [#allocation8], 4
          %s391 = int_to_ptr.vmem [resolvable:$true] %s390
          %393 = dma.hbm_to_vmem [thread:$0]  %s2, 16, %s391, [#allocation7]
        $region20: #{tpu_custom_call.1} parent=11 // pred_fallthru
          _
        // Predicated region
        $region21: #{tpu_custom_call.1} parent=11 // pred_check
          %p394 = pneg %p119
        $region22: #{tpu_custom_call.1} parent=11 // pred_check_branch
          %396 = sbr.rel (%p394) target = $region24
        $region23: #{tpu_custom_call.1} parent=11 // pred_region
          %s398 = ssub.s32 16, 16
          %399 = vsyncadd [#allocation10], %s398
          %s401 = sshll.u32 [#allocation9], 4
          %s402 = int_to_ptr.vmem [resolvable:$true] %s401
          %404 = dma.hbm_to_vmem [thread:$0]  %s3, 16, %s402, [#allocation10]
        $region24: #{tpu_custom_call.1} parent=11 // pred_fallthru
          _
        // Predicated region
        $region25: #{tpu_custom_call.1} parent=11 // pred_check
          %p405 = pneg %p140
        $region26: #{tpu_custom_call.1} parent=11 // pred_check_branch
          %407 = sbr.rel (%p405) target = $region28
        $region27: #{tpu_custom_call.1} parent=11 // pred_region
          %s409 = ssub.s32 16, 16
          %410 = vsyncadd [#allocation10], %s409
          %s412 = sshll.u32 [#allocation11], 4
          %s413 = int_to_ptr.vmem [resolvable:$true] %s412
          %415 = dma.hbm_to_vmem [thread:$0]  %s4, 16, %s413, [#allocation10]
        $region28: #{tpu_custom_call.1} parent=11 // pred_fallthru
          _
        // Predicated region
        $region29: #{tpu_custom_call.1} parent=11 // pred_check
          %p416 = pneg %p161
        $region30: #{tpu_custom_call.1} parent=11 // pred_check_branch
          %418 = sbr.rel (%p416) target = $region32
        $region31: #{tpu_custom_call.1} parent=11 // pred_region
          _
        $region32: #{tpu_custom_call.1} parent=11 // pred_fallthru
          _
        // Predicated region
        $region33: #{tpu_custom_call.1} parent=11 // pred_check
          %p419 = pneg %p182
        $region34: #{tpu_custom_call.1} parent=11 // pred_check_branch
          %421 = sbr.rel (%p419) target = $region36
        $region35: #{tpu_custom_call.1} parent=11 // pred_region
          %s423 = ssub.s32 3072, 3072
          %424 = vsyncadd [#allocation13], %s423
          %s425 = sshll.u32 [#allocation12], 4
          %s426 = int_to_ptr.vmem [resolvable:$true] %s425
          %431 = dma.hbm_to_vmem [thread:$0]  %s6, 3072, %s426, [#allocation13], 192, 192, 12
        $region36: #{tpu_custom_call.1} parent=11 // pred_fallthru
          _
        // Predicated region
        $region37: #{tpu_custom_call.1} parent=11 // pred_check
          %p432 = pneg %p203
        $region38: #{tpu_custom_call.1} parent=11 // pred_check_branch
          %434 = sbr.rel (%p432) target = $region40
        $region39: #{tpu_custom_call.1} parent=11 // pred_region
          _
        $region40: #{tpu_custom_call.1} parent=11 // pred_fallthru
          _
        // Predicated region
        $region41: #{tpu_custom_call.1} parent=11 // pred_check
          %p435 = pneg %p224
        $region42: #{tpu_custom_call.1} parent=11 // pred_check_branch
          %437 = sbr.rel (%p435) target = $region44
        $region43: #{tpu_custom_call.1} parent=11 // pred_region
          %s439 = ssub.s32 1024, 1024
          %440 = vsyncadd [#allocation13], %s439
          %s441 = sshll.u32 [#allocation14], 4
          %s442 = int_to_ptr.vmem [resolvable:$true] %s441
          %447 = dma.hbm_to_vmem [thread:$0]  %s8, 1024, %s442, [#allocation13], 64, 64, 4
        $region44: #{tpu_custom_call.1} parent=11 // pred_fallthru
          _
        // Predicated region
        $region45: #{tpu_custom_call.1} parent=11 // pred_check
          %p448 = pneg %p245
        $region46: #{tpu_custom_call.1} parent=11 // pred_check_branch
          %450 = sbr.rel (%p448) target = $region48
        $region47: #{tpu_custom_call.1} parent=11 // pred_region
          _
        $region48: #{tpu_custom_call.1} parent=11 // pred_fallthru
          _
        // Predicated region
        $region49: #{tpu_custom_call.1} parent=11 // pred_check
          %p451 = pneg %p266
        $region50: #{tpu_custom_call.1} parent=11 // pred_check_branch
          %453 = sbr.rel (%p451) target = $region52
        $region51: #{tpu_custom_call.1} parent=11 // pred_region
          %s455 = ssub.s32 4096, 4096
          %456 = vsyncadd [#allocation16], %s455
          %s457 = sshll.u32 [#allocation15], 4
          %s458 = int_to_ptr.vmem [resolvable:$true] %s457
          %463 = dma.hbm_to_vmem [thread:$0]  %s10, 4096, %s458, [#allocation16], 256, 256, 16
        $region52: #{tpu_custom_call.1} parent=11 // pred_fallthru
          _
        // Predicated region
        $region53: #{tpu_custom_call.1} parent=11 // pred_check
          %p464 = pneg %p287
        $region54: #{tpu_custom_call.1} parent=11 // pred_check_branch
          %466 = sbr.rel (%p464) target = $region56
        $region55: #{tpu_custom_call.1} parent=11 // pred_region
          _
        $region56: #{tpu_custom_call.1} parent=11 // pred_fallthru
          _
        // Predicated region
        $region57: #{tpu_custom_call.1} parent=11 // pred_check
          %p467 = pneg %p308
        $region58: #{tpu_custom_call.1} parent=11 // pred_check_branch
          %469 = sbr.rel (%p467) target = $region60
        $region59: #{tpu_custom_call.1} parent=11 // pred_region
          %s471 = ssub.s32 4096, 4096
          %472 = vsyncadd [#allocation16], %s471
          %s473 = sshll.u32 [#allocation17], 4
          %s474 = int_to_ptr.vmem [resolvable:$true] %s473
          %479 = dma.hbm_to_vmem [thread:$0]  %s12, 4096, %s474, [#allocation16], 64, 64, 4
        $region60: #{tpu_custom_call.1} parent=11 // pred_fallthru
          _
        // Predicated region
        $region61: #{tpu_custom_call.1} parent=11 // pred_check
          %p480 = pneg %p329
        $region62: #{tpu_custom_call.1} parent=11 // pred_check_branch
          %482 = sbr.rel (%p480) target = $region64
        $region63: #{tpu_custom_call.1} parent=11 // pred_region
          _
        $region64: #{tpu_custom_call.1} parent=11 // pred_fallthru
          _
      $region12: #{tpu_custom_call.1} parent=5 // pred_fallthru
        _
      %p483 = scmp.lt.s32.totalorder %s30, 2
      // Predicated region
      $region65: #{tpu_custom_call.1} parent=5 // pred_check
        %p484 = pneg %p483
      $region66: #{tpu_custom_call.1} parent=5 // pred_check_branch
        %486 = sbr.rel (%p484) target = $region68
      $region67: #{tpu_custom_call.1} parent=5 // pred_region
        // Predicated region
        $region69: #{tpu_custom_call.1} parent=67 // pred_check
          %p487 = pneg %p50
        $region70: #{tpu_custom_call.1} parent=67 // pred_check_branch
          %489 = sbr.rel (%p487) target = $region72
        $region71: #{tpu_custom_call.1} parent=67 // pred_region
          %s490 = sand.u32 %s40, 1
          %s491 = scalar_lea.sflag [#allocation4], %s490
          %s492 = sand.u32 %s40, 1
          %s493 = smul.addr %s492, 16
          %s494 = scalar_lea.vmem [#allocation3], %s493
          %s496 = ssub.s32 256, 256
          %497 = vsyncadd %s491, %s496
          %s498 = smul.addr %s30, 2
          %s499 = smul.addr %s498, 128
          %s500 = scalar_lea.hbm %s0, %s499
          %s501 = sshll.u32 %s494, 4
          %s502 = int_to_ptr.vmem [resolvable:$true] %s501
          %507 = dma.hbm_to_vmem [thread:$0]  %s500, 256, %s502, %s491, 128, 128, 8
        $region72: #{tpu_custom_call.1} parent=67 // pred_fallthru
          _
      $region68: #{tpu_custom_call.1} parent=5 // pred_fallthru
        _
      %p508 = scmp.le.s32.totalorder 1, %s30
      %p509 = scmp.lt.s32.totalorder %s30, 3
      %p510 = pnand %p508, %p509
      %p511 = pneg %p510
      // Predicated region
      $region73: #{tpu_custom_call.1} parent=5 // pred_check
        _
      $region74: #{tpu_custom_call.1} parent=5 // pred_check_branch
        %513 = sbr.rel (%p510) target = $region76
      $region75: #{tpu_custom_call.1} parent=5 // pred_region
        %s514 = ssub.s32 %s30, 1
        %s515 = sand.u32 %s43, 1
        %s516 = scalar_lea.sflag [#allocation4], %s515
        %s517 = sand.u32 %s43, 1
        %s518 = smul.addr %s517, 16
        %s519 = scalar_lea.vmem [#allocation3], %s518
        // Predicated region
        $region77: #{tpu_custom_call.1} parent=75 // pred_check
          %p520 = pneg %p56
        $region78: #{tpu_custom_call.1} parent=75 // pred_check_branch
          %522 = sbr.rel (%p520) target = $region80
        $region79: #{tpu_custom_call.1} parent=75 // pred_region
          %523 = dma.done %s516, 256
        $region80: #{tpu_custom_call.1} parent=75 // pred_fallthru
          _
        // Predicated region
        $region81: #{tpu_custom_call.1} parent=75 // pred_check
          %p524 = pneg %p77
        $region82: #{tpu_custom_call.1} parent=75 // pred_check_branch
          %526 = sbr.rel (%p524) target = $region84
        $region83: #{tpu_custom_call.1} parent=75 // pred_region
          %527 = dma.done [#allocation7], 256
        $region84: #{tpu_custom_call.1} parent=75 // pred_fallthru
          _
        // Predicated region
        $region85: #{tpu_custom_call.1} parent=75 // pred_check
          %p528 = pneg %p98
        $region86: #{tpu_custom_call.1} parent=75 // pred_check_branch
          %530 = sbr.rel (%p528) target = $region88
        $region87: #{tpu_custom_call.1} parent=75 // pred_region
          %531 = dma.done [#allocation7], 16
        $region88: #{tpu_custom_call.1} parent=75 // pred_fallthru
          _
        // Predicated region
        $region89: #{tpu_custom_call.1} parent=75 // pred_check
          %p532 = pneg %p119
        $region90: #{tpu_custom_call.1} parent=75 // pred_check_branch
          %534 = sbr.rel (%p532) target = $region92
        $region91: #{tpu_custom_call.1} parent=75 // pred_region
          %535 = dma.done [#allocation10], 16
        $region92: #{tpu_custom_call.1} parent=75 // pred_fallthru
          _
        // Predicated region
        $region93: #{tpu_custom_call.1} parent=75 // pred_check
          %p536 = pneg %p140
        $region94: #{tpu_custom_call.1} parent=75 // pred_check_branch
          %538 = sbr.rel (%p536) target = $region96
        $region95: #{tpu_custom_call.1} parent=75 // pred_region
          %539 = dma.done [#allocation10], 16
        $region96: #{tpu_custom_call.1} parent=75 // pred_fallthru
          _
        // Predicated region
        $region97: #{tpu_custom_call.1} parent=75 // pred_check
          %p540 = pneg %p182
        $region98: #{tpu_custom_call.1} parent=75 // pred_check_branch
          %542 = sbr.rel (%p540) target = $region100
        $region99: #{tpu_custom_call.1} parent=75 // pred_region
          %543 = dma.done [#allocation13], 3072
        $region100: #{tpu_custom_call.1} parent=75 // pred_fallthru
          _
        // Predicated region
        $region101: #{tpu_custom_call.1} parent=75 // pred_check
          %p544 = pneg %p224
        $region102: #{tpu_custom_call.1} parent=75 // pred_check_branch
          %546 = sbr.rel (%p544) target = $region104
        $region103: #{tpu_custom_call.1} parent=75 // pred_region
          %547 = dma.done [#allocation13], 1024
        $region104: #{tpu_custom_call.1} parent=75 // pred_fallthru
          _
        // Predicated region
        $region105: #{tpu_custom_call.1} parent=75 // pred_check
          %p548 = pneg %p266
        $region106: #{tpu_custom_call.1} parent=75 // pred_check_branch
          %550 = sbr.rel (%p548) target = $region108
        $region107: #{tpu_custom_call.1} parent=75 // pred_region
          %551 = dma.done [#allocation16], 4096
        $region108: #{tpu_custom_call.1} parent=75 // pred_fallthru
          _
        // Predicated region
        $region109: #{tpu_custom_call.1} parent=75 // pred_check
          %p552 = pneg %p308
        $region110: #{tpu_custom_call.1} parent=75 // pred_check_branch
          %554 = sbr.rel (%p552) target = $region112
        $region111: #{tpu_custom_call.1} parent=75 // pred_region
          %555 = dma.done [#allocation16], 4096
        $region112: #{tpu_custom_call.1} parent=75 // pred_fallthru
          _
        %s556 = sand.u32 %s43, 1
        %s557 = scalar_lea.sflag [#allocation4], %s556
        %s558 = sand.u32 %s43, 1
        %s559 = smul.addr %s558, 16
        %s560 = scalar_lea.vmem [#allocation3], %s559
        %p561 = pneg %p56
        %p562 = pneg %p53
        %p563 = pneg %p77
        %p564 = pneg %p74
        %p565 = pneg %p98
        %p566 = pneg %p95
        %p567 = pneg %p119
        %p568 = pneg %p116
        %p569 = pneg %p140
        %p570 = pneg %p137
        %p571 = pneg %p161
        %p572 = pneg %p158
        %p573 = pneg %p182
        %p574 = pneg %p179
        %p575 = pneg %p203
        %p576 = pneg %p200
        %p577 = pneg %p224
        %p578 = pneg %p221
        %p579 = pneg %p245
        %p580 = pneg %p242
        %p581 = pneg %p266
        %p582 = pneg %p263
        %p583 = pneg %p287
        %p584 = pneg %p284
        %p585 = pneg %p308
        %p586 = pneg %p305
        %p587 = pneg %p329
        %p588 = pneg %p326
        %p589 = pneg %p355
        %p590 = pneg %p352
        %s591 = sand.u32 %s342, 1
        %s592 = scalar_lea.sflag [#allocation5], %s591
        %s593 = sand.u32 %s342, 1
        %s594 = smul.addr %s593, 16
        %s595 = scalar_lea.vmem [#allocation18], %s594
        %v597 = vld [vmem:[%s519] sm:$0xff]
        %v598 = vld [vmem:[%s519 + $0x8] sm:$0xff]
        %599 = vadd.xlane.f32.xlu0 %v597
        %v600 = vpop.xlane.xlu0 %599
        %601 = vadd.xlane.f32.xlu0 %v598
        %v602 = vpop.xlane.xlu0 %601
        %v603 = vrcp.pop 128.0
        %v604 = vmul.f32 %v600, %v603
        %v605 = vmul.f32 %v602, %v603
        %v606 = vsub.f32 %v597, %v604
        %v607 = vsub.f32 %v598, %v605
        %v608 = vmul.f32 %v606, %v606
        %v609 = vmul.f32 %v607, %v607
        %610 = vadd.xlane.f32.xlu0 %v608
        %v611 = vpop.xlane.xlu0 %610
        %612 = vadd.xlane.f32.xlu0 %v609
        %v613 = vpop.xlane.xlu0 %612
        %v614 = vmul.f32 %v611, %v603
        %v615 = vmul.f32 %v613, %v603
        %v616 = vadd.f32 %v614, 1e-05
        %v617 = vadd.f32 %v615, 1e-05
        %v618 = vrsqrt.pop %v616
        %v619 = vrsqrt.pop %v617
        %v620 = vmul.f32 %v606, %v618
        %v621 = vmul.f32 %v607, %v619
        %v622 = vld [vmem:[#allocation8] sm:$0x1]
        %v624 = vlaneseq
        %v625 = vshrl.u32 %v624, 7
        %v626 = vsub.s32 0, %v625
        %v627 = vrot.slane %v622, %v626
        %v629 = vmul.f32 %v620, %v627
        %v630 = vmul.f32 %v621, %v627
        %v631 = vld [vmem:[#allocation9] sm:$0x1]
        %v633 = vlaneseq
        %v634 = vshrl.u32 %v633, 7
        %v635 = vsub.s32 0, %v634
        %v636 = vrot.slane %v631, %v635
        %v638 = vadd.f32 %v629, %v636
        %v639 = vadd.f32 %v630, %v636
        %v640 = vpack.c.bf16 %v639, %v638
        %v641 = vld [vmem:[#allocation12] sm:$0xff]
        %v642 = vld [vmem:[#allocation12 + $0x8] sm:$0xf]
        %v643 = vld [vmem:[#allocation12 + $0xc] sm:$0xff]
        %v644 = vld [vmem:[#allocation12 + $0x14] sm:$0xf]
        %v645 = vld [vmem:[#allocation12 + $0x18] sm:$0xff]
        %v646 = vld [vmem:[#allocation12 + $0x20] sm:$0xf]
        %v647 = vld [vmem:[#allocation12 + $0x24] sm:$0xff]
        %v648 = vld [vmem:[#allocation12 + $0x2c] sm:$0xf]
        %v649 = vld [vmem:[#allocation12 + $0x30] sm:$0xff]
        %v650 = vld [vmem:[#allocation12 + $0x38] sm:$0xf]
        %v651 = vld [vmem:[#allocation12 + $0x3c] sm:$0xff]
        %v652 = vld [vmem:[#allocation12 + $0x44] sm:$0xf]
        %v653 = vld [vmem:[#allocation12 + $0x48] sm:$0xff]
        %v654 = vld [vmem:[#allocation12 + $0x50] sm:$0xf]
        %v655 = vld [vmem:[#allocation12 + $0x54] sm:$0xff]
        %v656 = vld [vmem:[#allocation12 + $0x5c] sm:$0xf]
        %v657 = vld [vmem:[#allocation12 + $0x60] sm:$0xff]
        %v658 = vld [vmem:[#allocation12 + $0x68] sm:$0xf]
        %v659 = vld [vmem:[#allocation12 + $0x6c] sm:$0xff]
        %v660 = vld [vmem:[#allocation12 + $0x74] sm:$0xf]
        %v661 = vld [vmem:[#allocation12 + $0x78] sm:$0xff]
        %v662 = vld [vmem:[#allocation12 + $0x80] sm:$0xf]
        %v663 = vld [vmem:[#allocation12 + $0x84] sm:$0xff]
        %v664 = vld [vmem:[#allocation12 + $0x8c] sm:$0xf]
        %v665 = vld [vmem:[#allocation12 + $0x90] sm:$0xff]
        %v666 = vld [vmem:[#allocation12 + $0x98] sm:$0xf]
        %v667 = vld [vmem:[#allocation12 + $0x9c] sm:$0xff]
        %v668 = vld [vmem:[#allocation12 + $0xa4] sm:$0xf]
        %v669 = vld [vmem:[#allocation12 + $0xa8] sm:$0xff]
        %v670 = vld [vmem:[#allocation12 + $0xb0] sm:$0xf]
        %v671 = vld [vmem:[#allocation12 + $0xb4] sm:$0xff]
        %v672 = vld [vmem:[#allocation12 + $0xbc] sm:$0xf]
        %v673 = vld [vmem:[%s7] sm:$0x7]
        %v675 = vlaneseq
        %v676 = vshrl.u32 %v675, 7
        %v677 = vsub.s32 0, %v676
        %v678 = vrot.slane %v673, %v677
        %v679 = vlaneseq
        %v680 = vshrl.u32 %v679, 7
        %v681 = vsub.s32 1, %v680
        %v682 = vrot.slane %v673, %v681
        %v683 = vlaneseq
        %v684 = vshrl.u32 %v683, 7
        %v685 = vsub.s32 2, %v684
        %v686 = vrot.slane %v673, %v685
        %v722 = vunpack.c.l.b16 %v641
        %v723 = vunpack.c.h.b16 %v641
        %v724 = vunpack.c.l.b16 %v642
        %v725 = vunpack.c.l.b16 %v643
        %v726 = vunpack.c.h.b16 %v643
        %v727 = vunpack.c.l.b16 %v644
        %v728 = vunpack.c.l.b16 %v645
        %v729 = vunpack.c.h.b16 %v645
        %v730 = vunpack.c.l.b16 %v646
        %v731 = vunpack.c.l.b16 %v647
        %v732 = vunpack.c.h.b16 %v647
        %v733 = vunpack.c.l.b16 %v648
        %v734 = vunpack.c.l.b16 %v649
        %v735 = vunpack.c.h.b16 %v649
        %v736 = vunpack.c.l.b16 %v650
        %v737 = vunpack.c.l.b16 %v651
        %v738 = vunpack.c.h.b16 %v651
        %v739 = vunpack.c.l.b16 %v652
        %v740 = vunpack.c.l.b16 %v653
        %v741 = vunpack.c.h.b16 %v653
        %v742 = vunpack.c.l.b16 %v654
        %v743 = vunpack.c.l.b16 %v655
        %v744 = vunpack.c.h.b16 %v655
        %v745 = vunpack.c.l.b16 %v656
        %v746 = vunpack.c.l.b16 %v657
        %v747 = vunpack.c.h.b16 %v657
        %v748 = vunpack.c.l.b16 %v658
        %v749 = vunpack.c.l.b16 %v659
        %v750 = vunpack.c.h.b16 %v659
        %v751 = vunpack.c.l.b16 %v660
        %v752 = vunpack.c.l.b16 %v661
        %v753 = vunpack.c.h.b16 %v661
        %v754 = vunpack.c.l.b16 %v662
        %v755 = vunpack.c.l.b16 %v663
        %v756 = vunpack.c.h.b16 %v663
        %v757 = vunpack.c.l.b16 %v664
        %v758 = vunpack.c.l.b16 %v665
        %v759 = vunpack.c.h.b16 %v665
        %v760 = vunpack.c.l.b16 %v666
        %v761 = vunpack.c.l.b16 %v667
        %v762 = vunpack.c.h.b16 %v667
        %v763 = vunpack.c.l.b16 %v668
        %v764 = vunpack.c.l.b16 %v669
        %v765 = vunpack.c.h.b16 %v669
        %v766 = vunpack.c.l.b16 %v670
        %v767 = vunpack.c.l.b16 %v671
        %v768 = vunpack.c.h.b16 %v671
        %v769 = vunpack.c.l.b16 %v672
        %v770 = vpack.c.b16 %v725, %v722
        %v771 = vpack.c.b16 %v726, %v723
        %v772 = vpack.c.b16 %v727, %v724
        %v773 = vpack.c.b16 %v731, %v728
        %v774 = vpack.c.b16 %v732, %v729
        %v775 = vpack.c.b16 %v733, %v730
        %v776 = vpack.c.b16 %v737, %v734
        %v777 = vpack.c.b16 %v738, %v735
        %v778 = vpack.c.b16 %v739, %v736
        %v779 = vpack.c.b16 %v743, %v740
        %v780 = vpack.c.b16 %v744, %v741
        %v781 = vpack.c.b16 %v745, %v742
        %v782 = vpack.c.b16 %v749, %v746
        %v783 = vpack.c.b16 %v750, %v747
        %v784 = vpack.c.b16 %v751, %v748
        %v785 = vpack.c.b16 %v755, %v752
        %v786 = vpack.c.b16 %v756, %v753
        %v787 = vpack.c.b16 %v757, %v754
        %v788 = vpack.c.b16 %v761, %v758
        %v789 = vpack.c.b16 %v762, %v759
        %v790 = vpack.c.b16 %v763, %v760
        %v791 = vpack.c.b16 %v767, %v764
        %v792 = vpack.c.b16 %v768, %v765
        %v793 = vpack.c.b16 %v769, %v766
        %818 = vmatprep.subr.bf16.mxu0 %v792
        %819 = vmatpush1.bf16.msra.mxu0 %v791
        %820 = vmatprep.subr.bf16.mxu0 %v789
        %821 = vmatpush1.bf16.msra.mxu0 %v788
        %822 = vmatprep.subr.bf16.mxu0 %v786
        %823 = vmatpush1.bf16.msra.mxu0 %v785
        %824 = vmatprep.subr.bf16.mxu0 %v783
        %825 = vmatpush1.bf16.msra.mxu0 %v782
        %826 = vmatprep.subr.bf16.mxu0 %v780
        %827 = vmatpush1.bf16.msra.mxu0 %v779
        %828 = vmatprep.subr.bf16.mxu0 %v777
        %829 = vmatpush1.bf16.msra.mxu0 %v776
        %830 = vmatprep.subr.bf16.mxu0 %v774
        %831 = vmatpush1.bf16.msra.mxu0 %v773
        %832 = vmatprep.subr.bf16.mxu0 %v771
        %833 = vmatpush1.bf16.msra.mxu0 %v770
        %834 = vmatprep.subr.bf16.mxu0 0
        %835 = vmatpush2.bf16.msra.mxu0 0
        %836 = vmatprep.subr.bf16.mxu0 0
        %837 = vmatpush2.bf16.msra.mxu0 0
        %838 = vmatprep.subr.bf16.mxu0 0
        %839 = vmatpush2.bf16.msra.mxu0 0
        %840 = vmatprep.subr.bf16.mxu0 0
        %841 = vmatpush2.bf16.msra.mxu0 0
        %842 = vmatprep.subr.bf16.mxu0 0
        %843 = vmatpush2.bf16.msra.mxu0 0
        %844 = vmatprep.subr.bf16.mxu0 0
        %845 = vmatpush2.bf16.msra.mxu0 0
        %846 = vmatprep.subr.bf16.mxu0 0
        %847 = vmatpush2.bf16.msra.mxu0 0
        %848 = vmatprep.subr.bf16.mxu0 0
        %849 = vmatpush2.bf16.msra.mxu0 0
        %850 = vmatprep.mubr.bf16.mxu0 0
        %851 = vmatmul.mubr.bf16.gmra.mxu0 %v640
        %v852 = vpop.f32.mrf.mxu0
        %v853 = vadd.f32 %v678, %v852
        %v854 = vpop.f32.mrf.mxu0
        %v855 = vadd.f32 %v682, %v854
        %v856 = vpop.f32.mrf.mxu0
        %v857 = vadd.f32 %v678, %v856
        %v858 = vpop.f32.mrf.mxu0
        %v859 = vadd.f32 %v682, %v858
        %860 = vdwg.mxu0
        %861 = vmatprep.subr.bf16.mxu0 0
        %862 = vmatpush1.bf16.msra.mxu0 %v793
        %863 = vmatprep.subr.bf16.mxu0 0
        %864 = vmatpush1.bf16.msra.mxu0 %v790
        %865 = vmatprep.subr.bf16.mxu0 0
        %866 = vmatpush1.bf16.msra.mxu0 %v787
        %867 = vmatprep.subr.bf16.mxu0 0
        %868 = vmatpush1.bf16.msra.mxu0 %v784
        %869 = vmatprep.subr.bf16.mxu0 0
        %870 = vmatpush1.bf16.msra.mxu0 %v781
        %871 = vmatprep.subr.bf16.mxu0 0
        %872 = vmatpush1.bf16.msra.mxu0 %v778
        %873 = vmatprep.subr.bf16.mxu0 0
        %874 = vmatpush1.bf16.msra.mxu0 %v775
        %875 = vmatprep.subr.bf16.mxu0 0
        %876 = vmatpush1.bf16.msra.mxu0 %v772
        %877 = vmatprep.subr.bf16.mxu0 0
        %878 = vmatpush2.bf16.msra.mxu0 0
        %879 = vmatprep.subr.bf16.mxu0 0
        %880 = vmatpush2.bf16.msra.mxu0 0
        %881 = vmatprep.subr.bf16.mxu0 0
        %882 = vmatpush2.bf16.msra.mxu0 0
        %883 = vmatprep.subr.bf16.mxu0 0
        %884 = vmatpush2.bf16.msra.mxu0 0
        %885 = vmatprep.subr.bf16.mxu0 0
        %886 = vmatpush2.bf16.msra.mxu0 0
        %887 = vmatprep.subr.bf16.mxu0 0
        %888 = vmatpush2.bf16.msra.mxu0 0
        %889 = vmatprep.subr.bf16.mxu0 0
        %890 = vmatpush2.bf16.msra.mxu0 0
        %891 = vmatprep.subr.bf16.mxu0 0
        %892 = vmatpush2.bf16.msra.mxu0 0
        %893 = vmatprep.mubr.bf16.mxu0 0
        %894 = vmatmul.mubr.bf16.gmra.mxu0 %v640
        %v895 = vpop.f32.mrf.mxu0
        %v896 = vadd.f32 %v686, %v895
        %v897 = vpop.f32.mrf.mxu0
        %v898 = vpop.f32.mrf.mxu0
        %v899 = vadd.f32 %v686, %v898
        %v900 = vpop.f32.mrf.mxu0
        %901 = vdwg.mxu0
        %v902 = vmul.f32 %v853, 0.17677669
        %v903 = vmul.f32 %v857, 0.17677669
        %v904 = vpack.c.bf16 %v903, %v902
        %v905 = vpack.c.bf16 %v859, %v855
        %v906 = vpack.c.bf16 %v899, %v896
        %v907 = vld [vmem:[#allocation6] sm:$0xff]
        %v908 = vld [vmem:[#allocation6 + $0x8] sm:$0xff]
        %vm909 = vcmask 261120
        %v911 = vsel %vm909, %v904, 0
        %v914 = vsel %vm909, %v905, 0
        %916 = vmatprep.subr.bf16.mxu0 0
        %917 = vmatpush1.bf16.xpose.msra.mxu0 0
        %918 = vmatprep.subr.bf16.mxu0 0
        %919 = vmatpush1.bf16.xpose.msra.mxu0 0
        %920 = vmatprep.subr.bf16.mxu0 0
        %921 = vmatpush1.bf16.xpose.msra.mxu0 0
        %922 = vmatprep.subr.bf16.mxu0 0
        %923 = vmatpush1.bf16.xpose.msra.mxu0 0
        %924 = vmatprep.subr.bf16.mxu0 0
        %925 = vmatpush1.bf16.xpose.msra.mxu0 0
        %926 = vmatprep.subr.bf16.mxu0 0
        %927 = vmatpush1.bf16.xpose.msra.mxu0 0
        %928 = vmatprep.subr.bf16.mxu0 0
        %929 = vmatpush1.bf16.xpose.msra.mxu0 0
        %930 = vmatprep.subr.bf16.mxu0 0
        %931 = vmatpush1.bf16.xpose.msra.mxu0 %v914
        %932 = vmatprep.subr.bf16.mxu0 0
        %933 = vmatpush2.bf16.xpose.msra.mxu0 0
        %934 = vmatprep.subr.bf16.mxu0 0
        %935 = vmatpush2.bf16.xpose.msra.mxu0 0
        %936 = vmatprep.subr.bf16.mxu0 0
        %937 = vmatpush2.bf16.xpose.msra.mxu0 0
        %938 = vmatprep.subr.bf16.mxu0 0
        %939 = vmatpush2.bf16.xpose.msra.mxu0 0
        %940 = vmatprep.subr.bf16.mxu0 0
        %941 = vmatpush2.bf16.xpose.msra.mxu0 0
        %942 = vmatprep.subr.bf16.mxu0 0
        %943 = vmatpush2.bf16.xpose.msra.mxu0 0
        %944 = vmatprep.subr.bf16.mxu0 0
        %945 = vmatpush2.bf16.xpose.msra.mxu0 0
        %946 = vmatprep.subr.bf16.mxu0 0
        %947 = vmatpush2.bf16.xpose.msra.mxu0 0
        %948 = vmatprep.mubr.bf16.mxu0 0
        %949 = vmatmul.mubr.bf16.gmra.mxu0 %v911
        %v950 = vpop.f32.mrf.mxu0
        %v951 = vadd.f32 %v907, %v950
        %v952 = vpop.f32.mrf.mxu0
        %v953 = vpop.f32.mrf.mxu0
        %v954 = vadd.f32 %v908, %v953
        %v955 = vpop.f32.mrf.mxu0
        %956 = vdwg.mxu0
        %vm957 = vcmask 130048
        %v958 = vsel %vm957, %v951, -inf
        %959 = vmax.xlane.f32.xlu0 %v958
        %v960 = vpop.xlane.xlu0 %959
        %v961 = vsel %vm957, %v954, -inf
        %962 = vmax.xlane.f32.xlu0 %v961
        %v963 = vpop.xlane.xlu0 %962
        %v964 = vsub.f32 %v951, %v960
        %v965 = vsub.f32 %v954, %v963
        %v966 = vmul.f32 %v964, 1.442695
        %v967 = vpow.pop %v966
        %v968 = vmul.f32 %v965, 1.442695
        %v969 = vpow.pop %v968
        %v970 = vsel %vm957, %v967, 0.0
        %971 = vadd.xlane.f32.xlu0 %v970
        %v972 = vpop.xlane.xlu0 %971
        %v973 = vsel %vm957, %v969, 0.0
        %974 = vadd.xlane.f32.xlu0 %v973
        %v975 = vpop.xlane.xlu0 %974
        %v976 = vpack.c.bf16 %v969, %v967
        %v978 = vsel %vm957, %v976, 0
        %980 = vmatprep.subr.bf16.mxu0 0
        %981 = vmatpush1.bf16.msra.mxu0 0
        %982 = vmatprep.subr.bf16.mxu0 0
        %983 = vmatpush1.bf16.msra.mxu0 0
        %984 = vmatprep.subr.bf16.mxu0 0
        %985 = vmatpush1.bf16.msra.mxu0 0
        %986 = vmatprep.subr.bf16.mxu0 0
        %987 = vmatpush1.bf16.msra.mxu0 0
        %988 = vmatprep.subr.bf16.mxu0 0
        %989 = vmatpush1.bf16.msra.mxu0 0
        %990 = vmatprep.subr.bf16.mxu0 0
        %991 = vmatpush1.bf16.msra.mxu0 0
        %992 = vmatprep.subr.bf16.mxu0 0
        %993 = vmatpush1.bf16.msra.mxu0 0
        %994 = vmatprep.subr.bf16.mxu0 0
        %995 = vmatpush1.bf16.msra.mxu0 %v906
        %996 = vmatprep.subr.bf16.mxu0 0
        %997 = vmatpush2.bf16.msra.mxu0 0
        %998 = vmatprep.subr.bf16.mxu0 0
        %999 = vmatpush2.bf16.msra.mxu0 0
        %1000 = vmatprep.subr.bf16.mxu0 0
        %1001 = vmatpush2.bf16.msra.mxu0 0
        %1002 = vmatprep.subr.bf16.mxu0 0
        %1003 = vmatpush2.bf16.msra.mxu0 0
        %1004 = vmatprep.subr.bf16.mxu0 0
        %1005 = vmatpush2.bf16.msra.mxu0 0
        %1006 = vmatprep.subr.bf16.mxu0 0
        %1007 = vmatpush2.bf16.msra.mxu0 0
        %1008 = vmatprep.subr.bf16.mxu0 0
        %1009 = vmatpush2.bf16.msra.mxu0 0
        %1010 = vmatprep.subr.bf16.mxu0 0
        %1011 = vmatpush2.bf16.msra.mxu0 0
        %1012 = vmatprep.mubr.bf16.mxu0 0
        %1013 = vmatmul.mubr.bf16.gmra.mxu0 %v978
        %v1014 = vpop.f32.mrf.mxu0
        %v1015 = vadd.f32 0.0, %v1014
        %v1016 = vpop.f32.mrf.mxu0
        %v1017 = vpop.f32.mrf.mxu0
        %v1018 = vadd.f32 0.0, %v1017
        %v1019 = vpop.f32.mrf.mxu0
        %1020 = vdwg.mxu0
        %v1021 = vrcp.pop %v972
        %v1022 = vrcp.pop %v975
        %v1023 = vmul.f32 %v1015, %v1021
        %v1024 = vmul.f32 %v1018, %v1022
        %v1025 = vpack.c.bf16 %v1024, %v1023
        %v1027 = vunpack.c.l.b16 %v1025
        %v1028 = vunpack.c.h.b16 %v1025
        %v1029 = vpack.c.b16 %v1027, %v1027
        %v1030 = vpack.c.b16 %v1028, %v1028
        %vm1033 = vcmask 257024
        %1034 = vst.msk [vmem:[#allocation2] sm:$0xf] %vm1033, %v1029
        %1035 = vst.msk [vmem:[#allocation2 + $0x4] sm:$0xf] %vm1033, %v1030
        %1037 = vrot.lane.b32.xlu0 %v904, 96
        %v1038 = vpop.permute.xlu0 %1037
        %1040 = vrot.lane.b32.xlu0 %v905, 96
        %v1041 = vpop.permute.xlu0 %1040
        %v1043 = vsel %vm909, %v1038, 0
        %v1046 = vsel %vm909, %v1041, 0
        %1048 = vmatprep.subr.bf16.mxu0 0
        %1049 = vmatpush1.bf16.xpose.msra.mxu0 0
        %1050 = vmatprep.subr.bf16.mxu0 0
        %1051 = vmatpush1.bf16.xpose.msra.mxu0 0
        %1052 = vmatprep.subr.bf16.mxu0 0
        %1053 = vmatpush1.bf16.xpose.msra.mxu0 0
        %1054 = vmatprep.subr.bf16.mxu0 0
        %1055 = vmatpush1.bf16.xpose.msra.mxu0 0
        %1056 = vmatprep.subr.bf16.mxu0 0
        %1057 = vmatpush1.bf16.xpose.msra.mxu0 0
        %1058 = vmatprep.subr.bf16.mxu0 0
        %1059 = vmatpush1.bf16.xpose.msra.mxu0 0
        %1060 = vmatprep.subr.bf16.mxu0 0
        %1061 = vmatpush1.bf16.xpose.msra.mxu0 0
        %1062 = vmatprep.subr.bf16.mxu0 0
        %1063 = vmatpush1.bf16.xpose.msra.mxu0 %v1046
        %1064 = vmatprep.subr.bf16.mxu0 0
        %1065 = vmatpush2.bf16.xpose.msra.mxu0 0
        %1066 = vmatprep.subr.bf16.mxu0 0
        %1067 = vmatpush2.bf16.xpose.msra.mxu0 0
        %1068 = vmatprep.subr.bf16.mxu0 0
        %1069 = vmatpush2.bf16.xpose.msra.mxu0 0
        %1070 = vmatprep.subr.bf16.mxu0 0
        %1071 = vmatpush2.bf16.xpose.msra.mxu0 0
        %1072 = vmatprep.subr.bf16.mxu0 0
        %1073 = vmatpush2.bf16.xpose.msra.mxu0 0
        %1074 = vmatprep.subr.bf16.mxu0 0
        %1075 = vmatpush2.bf16.xpose.msra.mxu0 0
        %1076 = vmatprep.subr.bf16.mxu0 0
        %1077 = vmatpush2.bf16.xpose.msra.mxu0 0
        %1078 = vmatprep.subr.bf16.mxu0 0
        %1079 = vmatpush2.bf16.xpose.msra.mxu0 0
        %1080 = vmatprep.mubr.bf16.mxu0 0
        %1081 = vmatmul.mubr.bf16.gmra.mxu0 %v1043
        %v1082 = vpop.f32.mrf.mxu0
        %v1083 = vadd.f32 %v907, %v1082
        %v1084 = vpop.f32.mrf.mxu0
        %v1085 = vpop.f32.mrf.mxu0
        %v1086 = vadd.f32 %v908, %v1085
        %v1087 = vpop.f32.mrf.mxu0
        %1088 = vdwg.mxu0
        %v1089 = vsel %vm957, %v1083, -inf
        %1090 = vmax.xlane.f32.xlu0 %v1089
        %v1091 = vpop.xlane.xlu0 %1090
        %v1092 = vsel %vm957, %v1086, -inf
        %1093 = vmax.xlane.f32.xlu0 %v1092
        %v1094 = vpop.xlane.xlu0 %1093
        %v1095 = vsub.f32 %v1083, %v1091
        %v1096 = vsub.f32 %v1086, %v1094
        %v1097 = vmul.f32 %v1095, 1.442695
        %v1098 = vpow.pop %v1097
        %v1099 = vmul.f32 %v1096, 1.442695
        %v1100 = vpow.pop %v1099
        %v1101 = vsel %vm957, %v1098, 0.0
        %1102 = vadd.xlane.f32.xlu0 %v1101
        %v1103 = vpop.xlane.xlu0 %1102
        %v1104 = vsel %vm957, %v1100, 0.0
        %1105 = vadd.xlane.f32.xlu0 %v1104
        %v1106 = vpop.xlane.xlu0 %1105
        %v1107 = vpack.c.bf16 %v1100, %v1098
        %1109 = vrot.lane.b32.xlu0 %v906, 96
        %v1110 = vpop.permute.xlu0 %1109
        %v1113 = vsel %vm957, %v1107, 0
        %1115 = vmatprep.subr.bf16.mxu0 0
        %1116 = vmatpush1.bf16.msra.mxu0 0
        %1117 = vmatprep.subr.bf16.mxu0 0
        %1118 = vmatpush1.bf16.msra.mxu0 0
        %1119 = vmatprep.subr.bf16.mxu0 0
        %1120 = vmatpush1.bf16.msra.mxu0 0
        %1121 = vmatprep.subr.bf16.mxu0 0
        %1122 = vmatpush1.bf16.msra.mxu0 0
        %1123 = vmatprep.subr.bf16.mxu0 0
        %1124 = vmatpush1.bf16.msra.mxu0 0
        %1125 = vmatprep.subr.bf16.mxu0 0
        %1126 = vmatpush1.bf16.msra.mxu0 0
        %1127 = vmatprep.subr.bf16.mxu0 0
        %1128 = vmatpush1.bf16.msra.mxu0 0
        %1129 = vmatprep.subr.bf16.mxu0 0
        %1130 = vmatpush1.bf16.msra.mxu0 %v1110
        %1131 = vmatprep.subr.bf16.mxu0 0
        %1132 = vmatpush2.bf16.msra.mxu0 0
        %1133 = vmatprep.subr.bf16.mxu0 0
        %1134 = vmatpush2.bf16.msra.mxu0 0
        %1135 = vmatprep.subr.bf16.mxu0 0
        %1136 = vmatpush2.bf16.msra.mxu0 0
        %1137 = vmatprep.subr.bf16.mxu0 0
        %1138 = vmatpush2.bf16.msra.mxu0 0
        %1139 = vmatprep.subr.bf16.mxu0 0
        %1140 = vmatpush2.bf16.msra.mxu0 0
        %1141 = vmatprep.subr.bf16.mxu0 0
        %1142 = vmatpush2.bf16.msra.mxu0 0
        %1143 = vmatprep.subr.bf16.mxu0 0
        %1144 = vmatpush2.bf16.msra.mxu0 0
        %1145 = vmatprep.subr.bf16.mxu0 0
        %1146 = vmatpush2.bf16.msra.mxu0 0
        %1147 = vmatprep.mubr.bf16.mxu0 0
        %1148 = vmatmul.mubr.bf16.gmra.mxu0 %v1113
        %v1149 = vpop.f32.mrf.mxu0
        %v1150 = vadd.f32 0.0, %v1149
        %v1151 = vpop.f32.mrf.mxu0
        %v1152 = vpop.f32.mrf.mxu0
        %v1153 = vadd.f32 0.0, %v1152
        %v1154 = vpop.f32.mrf.mxu0
        %1155 = vdwg.mxu0
        %v1156 = vrcp.pop %v1103
        %v1157 = vrcp.pop %v1106
        %v1158 = vmul.f32 %v1150, %v1156
        %v1159 = vmul.f32 %v1153, %v1157
        %v1160 = vpack.c.bf16 %v1159, %v1158
        %v1162 = vunpack.c.l.b16 %v1160
        %v1163 = vunpack.c.h.b16 %v1160
        %v1164 = vpack.c.b16 %v1162, %v1162
        %v1165 = vpack.c.b16 %v1163, %v1163
        %1166 = vrot.lane.b32.xlu0 %v1164, 32
        %v1167 = vpop.permute.xlu0 %1166
        %1168 = vrot.lane.b32.xlu0 %v1165, 32
        %v1169 = vpop.permute.xlu0 %1168
        %vm1172 = vcmask 519424
        %1173 = vst.msk [vmem:[#allocation2] sm:$0xf] %vm1172, %v1167
        %1174 = vst.msk [vmem:[#allocation2 + $0x4] sm:$0xf] %vm1172, %v1169
        %1175 = vrot.lane.b32.xlu0 %v904, 64
        %v1176 = vpop.permute.xlu0 %1175
        %1177 = vrot.lane.b32.xlu0 %v905, 64
        %v1178 = vpop.permute.xlu0 %1177
        %v1180 = vsel %vm909, %v1176, 0
        %v1183 = vsel %vm909, %v1178, 0
        %1185 = vmatprep.subr.bf16.mxu0 0
        %1186 = vmatpush1.bf16.xpose.msra.mxu0 0
        %1187 = vmatprep.subr.bf16.mxu0 0
        %1188 = vmatpush1.bf16.xpose.msra.mxu0 0
        %1189 = vmatprep.subr.bf16.mxu0 0
        %1190 = vmatpush1.bf16.xpose.msra.mxu0 0
        %1191 = vmatprep.subr.bf16.mxu0 0
        %1192 = vmatpush1.bf16.xpose.msra.mxu0 0
        %1193 = vmatprep.subr.bf16.mxu0 0
        %1194 = vmatpush1.bf16.xpose.msra.mxu0 0
        %1195 = vmatprep.subr.bf16.mxu0 0
        %1196 = vmatpush1.bf16.xpose.msra.mxu0 0
        %1197 = vmatprep.subr.bf16.mxu0 0
        %1198 = vmatpush1.bf16.xpose.msra.mxu0 0
        %1199 = vmatprep.subr.bf16.mxu0 0
        %1200 = vmatpush1.bf16.xpose.msra.mxu0 %v1183
        %1201 = vmatprep.subr.bf16.mxu0 0
        %1202 = vmatpush2.bf16.xpose.msra.mxu0 0
        %1203 = vmatprep.subr.bf16.mxu0 0
        %1204 = vmatpush2.bf16.xpose.msra.mxu0 0
        %1205 = vmatprep.subr.bf16.mxu0 0
        %1206 = vmatpush2.bf16.xpose.msra.mxu0 0
        %1207 = vmatprep.subr.bf16.mxu0 0
        %1208 = vmatpush2.bf16.xpose.msra.mxu0 0
        %1209 = vmatprep.subr.bf16.mxu0 0
        %1210 = vmatpush2.bf16.xpose.msra.mxu0 0
        %1211 = vmatprep.subr.bf16.mxu0 0
        %1212 = vmatpush2.bf16.xpose.msra.mxu0 0
        %1213 = vmatprep.subr.bf16.mxu0 0
        %1214 = vmatpush2.bf16.xpose.msra.mxu0 0
        %1215 = vmatprep.subr.bf16.mxu0 0
        %1216 = vmatpush2.bf16.xpose.msra.mxu0 0
        %1217 = vmatprep.mubr.bf16.mxu0 0
        %1218 = vmatmul.mubr.bf16.gmra.mxu0 %v1180
        %v1219 = vpop.f32.mrf.mxu0
        %v1220 = vadd.f32 %v907, %v1219
        %v1221 = vpop.f32.mrf.mxu0
        %v1222 = vpop.f32.mrf.mxu0
        %v1223 = vadd.f32 %v908, %v1222
        %v1224 = vpop.f32.mrf.mxu0
        %1225 = vdwg.mxu0
        %v1226 = vsel %vm957, %v1220, -inf
        %1227 = vmax.xlane.f32.xlu0 %v1226
        %v1228 = vpop.xlane.xlu0 %1227
        %v1229 = vsel %vm957, %v1223, -inf
        %1230 = vmax.xlane.f32.xlu0 %v1229
        %v1231 = vpop.xlane.xlu0 %1230
        %v1232 = vsub.f32 %v1220, %v1228
        %v1233 = vsub.f32 %v1223, %v1231
        %v1234 = vmul.f32 %v1232, 1.442695
        %v1235 = vpow.pop %v1234
        %v1236 = vmul.f32 %v1233, 1.442695
        %v1237 = vpow.pop %v1236
        %v1238 = vsel %vm957, %v1235, 0.0
        %1239 = vadd.xlane.f32.xlu0 %v1238
        %v1240 = vpop.xlane.xlu0 %1239
        %v1241 = vsel %vm957, %v1237, 0.0
        %1242 = vadd.xlane.f32.xlu0 %v1241
        %v1243 = vpop.xlane.xlu0 %1242
        %v1244 = vpack.c.bf16 %v1237, %v1235
        %1245 = vrot.lane.b32.xlu0 %v906, 64
        %v1246 = vpop.permute.xlu0 %1245
        %v1249 = vsel %vm957, %v1244, 0
        %1251 = vmatprep.subr.bf16.mxu0 0
        %1252 = vmatpush1.bf16.msra.mxu0 0
        %1253 = vmatprep.subr.bf16.mxu0 0
        %1254 = vmatpush1.bf16.msra.mxu0 0
        %1255 = vmatprep.subr.bf16.mxu0 0
        %1256 = vmatpush1.bf16.msra.mxu0 0
        %1257 = vmatprep.subr.bf16.mxu0 0
        %1258 = vmatpush1.bf16.msra.mxu0 0
        %1259 = vmatprep.subr.bf16.mxu0 0
        %1260 = vmatpush1.bf16.msra.mxu0 0
        %1261 = vmatprep.subr.bf16.mxu0 0
        %1262 = vmatpush1.bf16.msra.mxu0 0
        %1263 = vmatprep.subr.bf16.mxu0 0
        %1264 = vmatpush1.bf16.msra.mxu0 0
        %1265 = vmatprep.subr.bf16.mxu0 0
        %1266 = vmatpush1.bf16.msra.mxu0 %v1246
        %1267 = vmatprep.subr.bf16.mxu0 0
        %1268 = vmatpush2.bf16.msra.mxu0 0
        %1269 = vmatprep.subr.bf16.mxu0 0
        %1270 = vmatpush2.bf16.msra.mxu0 0
        %1271 = vmatprep.subr.bf16.mxu0 0
        %1272 = vmatpush2.bf16.msra.mxu0 0
        %1273 = vmatprep.subr.bf16.mxu0 0
        %1274 = vmatpush2.bf16.msra.mxu0 0
        %1275 = vmatprep.subr.bf16.mxu0 0
        %1276 = vmatpush2.bf16.msra.mxu0 0
        %1277 = vmatprep.subr.bf16.mxu0 0
        %1278 = vmatpush2.bf16.msra.mxu0 0
        %1279 = vmatprep.subr.bf16.mxu0 0
        %1280 = vmatpush2.bf16.msra.mxu0 0
        %1281 = vmatprep.subr.bf16.mxu0 0
        %1282 = vmatpush2.bf16.msra.mxu0 0
        %1283 = vmatprep.mubr.bf16.mxu0 0
        %1284 = vmatmul.mubr.bf16.gmra.mxu0 %v1249
        %v1285 = vpop.f32.mrf.mxu0
        %v1286 = vadd.f32 0.0, %v1285
        %v1287 = vpop.f32.mrf.mxu0
        %v1288 = vpop.f32.mrf.mxu0
        %v1289 = vadd.f32 0.0, %v1288
        %v1290 = vpop.f32.mrf.mxu0
        %1291 = vdwg.mxu0
        %v1292 = vrcp.pop %v1240
        %v1293 = vrcp.pop %v1243
        %v1294 = vmul.f32 %v1286, %v1292
        %v1295 = vmul.f32 %v1289, %v1293
        %v1296 = vpack.c.bf16 %v1295, %v1294
        %v1298 = vunpack.c.l.b16 %v1296
        %v1299 = vunpack.c.h.b16 %v1296
        %v1300 = vpack.c.b16 %v1298, %v1298
        %v1301 = vpack.c.b16 %v1299, %v1299
        %1302 = vrot.lane.b32.xlu0 %v1300, 64
        %v1303 = vpop.permute.xlu0 %1302
        %1304 = vrot.lane.b32.xlu0 %v1301, 64
        %v1305 = vpop.permute.xlu0 %1304
        %vm1308 = vcmask 781824
        %1309 = vst.msk [vmem:[#allocation2] sm:$0xf] %vm1308, %v1303
        %1310 = vst.msk [vmem:[#allocation2 + $0x4] sm:$0xf] %vm1308, %v1305
        %1311 = vrot.lane.b32.xlu0 %v904, 32
        %v1312 = vpop.permute.xlu0 %1311
        %1313 = vrot.lane.b32.xlu0 %v905, 32
        %v1314 = vpop.permute.xlu0 %1313
        %v1316 = vsel %vm909, %v1312, 0
        %v1319 = vsel %vm909, %v1314, 0
        %1321 = vmatprep.subr.bf16.mxu0 0
        %1322 = vmatpush1.bf16.xpose.msra.mxu0 0
        %1323 = vmatprep.subr.bf16.mxu0 0
        %1324 = vmatpush1.bf16.xpose.msra.mxu0 0
        %1325 = vmatprep.subr.bf16.mxu0 0
        %1326 = vmatpush1.bf16.xpose.msra.mxu0 0
        %1327 = vmatprep.subr.bf16.mxu0 0
        %1328 = vmatpush1.bf16.xpose.msra.mxu0 0
        %1329 = vmatprep.subr.bf16.mxu0 0
        %1330 = vmatpush1.bf16.xpose.msra.mxu0 0
        %1331 = vmatprep.subr.bf16.mxu0 0
        %1332 = vmatpush1.bf16.xpose.msra.mxu0 0
        %1333 = vmatprep.subr.bf16.mxu0 0
        %1334 = vmatpush1.bf16.xpose.msra.mxu0 0
        %1335 = vmatprep.subr.bf16.mxu0 0
        %1336 = vmatpush1.bf16.xpose.msra.mxu0 %v1319
        %1337 = vmatprep.subr.bf16.mxu0 0
        %1338 = vmatpush2.bf16.xpose.msra.mxu0 0
        %1339 = vmatprep.subr.bf16.mxu0 0
        %1340 = vmatpush2.bf16.xpose.msra.mxu0 0
        %1341 = vmatprep.subr.bf16.mxu0 0
        %1342 = vmatpush2.bf16.xpose.msra.mxu0 0
        %1343 = vmatprep.subr.bf16.mxu0 0
        %1344 = vmatpush2.bf16.xpose.msra.mxu0 0
        %1345 = vmatprep.subr.bf16.mxu0 0
        %1346 = vmatpush2.bf16.xpose.msra.mxu0 0
        %1347 = vmatprep.subr.bf16.mxu0 0
        %1348 = vmatpush2.bf16.xpose.msra.mxu0 0
        %1349 = vmatprep.subr.bf16.mxu0 0
        %1350 = vmatpush2.bf16.xpose.msra.mxu0 0
        %1351 = vmatprep.subr.bf16.mxu0 0
        %1352 = vmatpush2.bf16.xpose.msra.mxu0 0
        %1353 = vmatprep.mubr.bf16.mxu0 0
        %1354 = vmatmul.mubr.bf16.gmra.mxu0 %v1316
        %v1355 = vpop.f32.mrf.mxu0
        %v1356 = vadd.f32 %v907, %v1355
        %v1357 = vpop.f32.mrf.mxu0
        %v1358 = vpop.f32.mrf.mxu0
        %v1359 = vadd.f32 %v908, %v1358
        %v1360 = vpop.f32.mrf.mxu0
        %1361 = vdwg.mxu0
        %v1362 = vsel %vm957, %v1356, -inf
        %1363 = vmax.xlane.f32.xlu0 %v1362
        %v1364 = vpop.xlane.xlu0 %1363
        %v1365 = vsel %vm957, %v1359, -inf
        %1366 = vmax.xlane.f32.xlu0 %v1365
        %v1367 = vpop.xlane.xlu0 %1366
        %v1368 = vsub.f32 %v1356, %v1364
        %v1369 = vsub.f32 %v1359, %v1367
        %v1370 = vmul.f32 %v1368, 1.442695
        %v1371 = vpow.pop %v1370
        %v1372 = vmul.f32 %v1369, 1.442695
        %v1373 = vpow.pop %v1372
        %v1374 = vsel %vm957, %v1371, 0.0
        %1375 = vadd.xlane.f32.xlu0 %v1374
        %v1376 = vpop.xlane.xlu0 %1375
        %v1377 = vsel %vm957, %v1373, 0.0
        %1378 = vadd.xlane.f32.xlu0 %v1377
        %v1379 = vpop.xlane.xlu0 %1378
        %v1380 = vpack.c.bf16 %v1373, %v1371
        %1381 = vrot.lane.b32.xlu0 %v906, 32
        %v1382 = vpop.permute.xlu0 %1381
        %v1385 = vsel %vm957, %v1380, 0
        %1387 = vmatprep.subr.bf16.mxu0 0
        %1388 = vmatpush1.bf16.msra.mxu0 0
        %1389 = vmatprep.subr.bf16.mxu0 0
        %1390 = vmatpush1.bf16.msra.mxu0 0
        %1391 = vmatprep.subr.bf16.mxu0 0
        %1392 = vmatpush1.bf16.msra.mxu0 0
        %1393 = vmatprep.subr.bf16.mxu0 0
        %1394 = vmatpush1.bf16.msra.mxu0 0
        %1395 = vmatprep.subr.bf16.mxu0 0
        %1396 = vmatpush1.bf16.msra.mxu0 0
        %1397 = vmatprep.subr.bf16.mxu0 0
        %1398 = vmatpush1.bf16.msra.mxu0 0
        %1399 = vmatprep.subr.bf16.mxu0 0
        %1400 = vmatpush1.bf16.msra.mxu0 0
        %1401 = vmatprep.subr.bf16.mxu0 0
        %1402 = vmatpush1.bf16.msra.mxu0 %v1382
        %1403 = vmatprep.subr.bf16.mxu0 0
        %1404 = vmatpush2.bf16.msra.mxu0 0
        %1405 = vmatprep.subr.bf16.mxu0 0
        %1406 = vmatpush2.bf16.msra.mxu0 0
        %1407 = vmatprep.subr.bf16.mxu0 0
        %1408 = vmatpush2.bf16.msra.mxu0 0
        %1409 = vmatprep.subr.bf16.mxu0 0
        %1410 = vmatpush2.bf16.msra.mxu0 0
        %1411 = vmatprep.subr.bf16.mxu0 0
        %1412 = vmatpush2.bf16.msra.mxu0 0
        %1413 = vmatprep.subr.bf16.mxu0 0
        %1414 = vmatpush2.bf16.msra.mxu0 0
        %1415 = vmatprep.subr.bf16.mxu0 0
        %1416 = vmatpush2.bf16.msra.mxu0 0
        %1417 = vmatprep.subr.bf16.mxu0 0
        %1418 = vmatpush2.bf16.msra.mxu0 0
        %1419 = vmatprep.mubr.bf16.mxu0 0
        %1420 = vmatmul.mubr.bf16.gmra.mxu0 %v1385
        %v1421 = vpop.f32.mrf.mxu0
        %v1422 = vadd.f32 0.0, %v1421
        %v1423 = vpop.f32.mrf.mxu0
        %v1424 = vpop.f32.mrf.mxu0
        %v1425 = vadd.f32 0.0, %v1424
        %v1426 = vpop.f32.mrf.mxu0
        %1427 = vdwg.mxu0
        %v1428 = vrcp.pop %v1376
        %v1429 = vrcp.pop %v1379
        %v1430 = vmul.f32 %v1422, %v1428
        %v1431 = vmul.f32 %v1425, %v1429
        %v1432 = vpack.c.bf16 %v1431, %v1430
        %v1434 = vunpack.c.l.b16 %v1432
        %v1435 = vunpack.c.h.b16 %v1432
        %v1436 = vpack.c.b16 %v1434, %v1434
        %v1437 = vpack.c.b16 %v1435, %v1435
        %1438 = vrot.lane.b32.xlu0 %v1436, 96
        %v1439 = vpop.permute.xlu0 %1438
        %1440 = vrot.lane.b32.xlu0 %v1437, 96
        %v1441 = vpop.permute.xlu0 %1440
        %vm1444 = vcmask 1044224
        %1445 = vst.msk [vmem:[#allocation2] sm:$0xf] %vm1444, %v1439
        %1446 = vst.msk [vmem:[#allocation2 + $0x4] sm:$0xf] %vm1444, %v1441
        %v1447 = vld [vmem:[#allocation2] sm:$0xf]
        %v1448 = vld [vmem:[#allocation2 + $0x4] sm:$0xf]
        %v1449 = vld [vmem:[#allocation14] sm:$0xf]
        %v1450 = vld [vmem:[#allocation14 + $0x4] sm:$0xf]
        %v1451 = vld [vmem:[#allocation14 + $0x8] sm:$0xf]
        %v1452 = vld [vmem:[#allocation14 + $0xc] sm:$0xf]
        %v1453 = vld [vmem:[#allocation14 + $0x10] sm:$0xf]
        %v1454 = vld [vmem:[#allocation14 + $0x14] sm:$0xf]
        %v1455 = vld [vmem:[#allocation14 + $0x18] sm:$0xf]
        %v1456 = vld [vmem:[#allocation14 + $0x1c] sm:$0xf]
        %v1457 = vld [vmem:[#allocation14 + $0x20] sm:$0xf]
        %v1458 = vld [vmem:[#allocation14 + $0x24] sm:$0xf]
        %v1459 = vld [vmem:[#allocation14 + $0x28] sm:$0xf]
        %v1460 = vld [vmem:[#allocation14 + $0x2c] sm:$0xf]
        %v1461 = vld [vmem:[#allocation14 + $0x30] sm:$0xf]
        %v1462 = vld [vmem:[#allocation14 + $0x34] sm:$0xf]
        %v1463 = vld [vmem:[#allocation14 + $0x38] sm:$0xf]
        %v1464 = vld [vmem:[#allocation14 + $0x3c] sm:$0xf]
        %v1465 = vld [vmem:[%s9] sm:$0x1]
        %v1467 = vlaneseq
        %v1468 = vshrl.u32 %v1467, 7
        %v1469 = vsub.s32 0, %v1468
        %v1470 = vrot.slane %v1465, %v1469
        %v1474 = vunpack.c.l.b16 %v1447
        %v1475 = vunpack.c.l.b16 %v1448
        %v1476 = vpack.c.b16 %v1475, %v1474
        %v1494 = vunpack.c.l.b16 %v1449
        %v1495 = vunpack.c.l.b16 %v1450
        %v1496 = vunpack.c.l.b16 %v1451
        %v1497 = vunpack.c.l.b16 %v1452
        %v1498 = vunpack.c.l.b16 %v1453
        %v1499 = vunpack.c.l.b16 %v1454
        %v1500 = vunpack.c.l.b16 %v1455
        %v1501 = vunpack.c.l.b16 %v1456
        %v1502 = vunpack.c.l.b16 %v1457
        %v1503 = vunpack.c.l.b16 %v1458
        %v1504 = vunpack.c.l.b16 %v1459
        %v1505 = vunpack.c.l.b16 %v1460
        %v1506 = vunpack.c.l.b16 %v1461
        %v1507 = vunpack.c.l.b16 %v1462
        %v1508 = vunpack.c.l.b16 %v1463
        %v1509 = vunpack.c.l.b16 %v1464
        %v1510 = vpack.c.b16 %v1495, %v1494
        %v1511 = vpack.c.b16 %v1497, %v1496
        %v1512 = vpack.c.b16 %v1499, %v1498
        %v1513 = vpack.c.b16 %v1501, %v1500
        %v1514 = vpack.c.b16 %v1503, %v1502
        %v1515 = vpack.c.b16 %v1505, %v1504
        %v1516 = vpack.c.b16 %v1507, %v1506
        %v1517 = vpack.c.b16 %v1509, %v1508
        %1526 = vmatprep.subr.bf16.mxu0 0
        %1527 = vmatpush1.bf16.msra.mxu0 %v1517
        %1528 = vmatprep.subr.bf16.mxu0 0
        %1529 = vmatpush1.bf16.msra.mxu0 %v1516
        %1530 = vmatprep.subr.bf16.mxu0 0
        %1531 = vmatpush1.bf16.msra.mxu0 %v1515
        %1532 = vmatprep.subr.bf16.mxu0 0
        %1533 = vmatpush1.bf16.msra.mxu0 %v1514
        %1534 = vmatprep.subr.bf16.mxu0 0
        %1535 = vmatpush1.bf16.msra.mxu0 %v1513
        %1536 = vmatprep.subr.bf16.mxu0 0
        %1537 = vmatpush1.bf16.msra.mxu0 %v1512
        %1538 = vmatprep.subr.bf16.mxu0 0
        %1539 = vmatpush1.bf16.msra.mxu0 %v1511
        %1540 = vmatprep.subr.bf16.mxu0 0
        %1541 = vmatpush1.bf16.msra.mxu0 %v1510
        %1542 = vmatprep.subr.bf16.mxu0 0
        %1543 = vmatpush2.bf16.msra.mxu0 0
        %1544 = vmatprep.subr.bf16.mxu0 0
        %1545 = vmatpush2.bf16.msra.mxu0 0
        %1546 = vmatprep.subr.bf16.mxu0 0
        %1547 = vmatpush2.bf16.msra.mxu0 0
        %1548 = vmatprep.subr.bf16.mxu0 0
        %1549 = vmatpush2.bf16.msra.mxu0 0
        %1550 = vmatprep.subr.bf16.mxu0 0
        %1551 = vmatpush2.bf16.msra.mxu0 0
        %1552 = vmatprep.subr.bf16.mxu0 0
        %1553 = vmatpush2.bf16.msra.mxu0 0
        %1554 = vmatprep.subr.bf16.mxu0 0
        %1555 = vmatpush2.bf16.msra.mxu0 0
        %1556 = vmatprep.subr.bf16.mxu0 0
        %1557 = vmatpush2.bf16.msra.mxu0 0
        %1558 = vmatprep.mubr.bf16.mxu0 0
        %1559 = vmatmul.mubr.bf16.gmra.mxu0 %v1476
        %v1560 = vpop.f32.mrf.mxu0
        %v1561 = vadd.f32 %v1470, %v1560
        %v1562 = vpop.f32.mrf.mxu0
        %v1563 = vpop.f32.mrf.mxu0
        %v1564 = vadd.f32 %v1470, %v1563
        %v1565 = vpop.f32.mrf.mxu0
        %1566 = vdwg.mxu0
        %v1567 = vadd.f32 %v597, %v1561
        %v1568 = vadd.f32 %v598, %v1564
        %1569 = vadd.xlane.f32.xlu0 %v1567
        %v1570 = vpop.xlane.xlu0 %1569
        %1571 = vadd.xlane.f32.xlu0 %v1568
        %v1572 = vpop.xlane.xlu0 %1571
        %v1573 = vmul.f32 %v1570, %v603
        %v1574 = vmul.f32 %v1572, %v603
        %v1575 = vsub.f32 %v1567, %v1573
        %v1576 = vsub.f32 %v1568, %v1574
        %v1577 = vmul.f32 %v1575, %v1575
        %v1578 = vmul.f32 %v1576, %v1576
        %1579 = vadd.xlane.f32.xlu0 %v1577
        %v1580 = vpop.xlane.xlu0 %1579
        %1581 = vadd.xlane.f32.xlu0 %v1578
        %v1582 = vpop.xlane.xlu0 %1581
        %v1583 = vmul.f32 %v1580, %v603
        %v1584 = vmul.f32 %v1582, %v603
        %v1585 = vadd.f32 %v1583, 1e-05
        %v1586 = vadd.f32 %v1584, 1e-05
        %v1587 = vrsqrt.pop %v1585
        %v1588 = vrsqrt.pop %v1586
        %v1589 = vmul.f32 %v1575, %v1587
        %v1590 = vmul.f32 %v1576, %v1588
        %v1591 = vld [vmem:[#allocation11] sm:$0x1]
        %v1593 = vlaneseq
        %v1594 = vshrl.u32 %v1593, 7
        %v1595 = vsub.s32 0, %v1594
        %v1596 = vrot.slane %v1591, %v1595
        %v1598 = vmul.f32 %v1589, %v1596
        %v1599 = vmul.f32 %v1590, %v1596
        %v1600 = vld [vmem:[%s5] sm:$0x1]
        %v1602 = vlaneseq
        %v1603 = vshrl.u32 %v1602, 7
        %v1604 = vsub.s32 0, %v1603
        %v1605 = vrot.slane %v1600, %v1604
        %v1607 = vadd.f32 %v1598, %v1605
        %v1608 = vadd.f32 %v1599, %v1605
        %v1609 = vpack.c.bf16 %v1608, %v1607
        %v1610 = vld [vmem:[#allocation15] sm:$0xff]
        %v1611 = vld [vmem:[#allocation15 + $0x8] sm:$0xff]
        %v1612 = vld [vmem:[#allocation15 + $0x10] sm:$0xff]
        %v1613 = vld [vmem:[#allocation15 + $0x18] sm:$0xff]
        %v1614 = vld [vmem:[#allocation15 + $0x20] sm:$0xff]
        %v1615 = vld [vmem:[#allocation15 + $0x28] sm:$0xff]
        %v1616 = vld [vmem:[#allocation15 + $0x30] sm:$0xff]
        %v1617 = vld [vmem:[#allocation15 + $0x38] sm:$0xff]
        %v1618 = vld [vmem:[#allocation15 + $0x40] sm:$0xff]
        %v1619 = vld [vmem:[#allocation15 + $0x48] sm:$0xff]
        %v1620 = vld [vmem:[#allocation15 + $0x50] sm:$0xff]
        %v1621 = vld [vmem:[#allocation15 + $0x58] sm:$0xff]
        %v1622 = vld [vmem:[#allocation15 + $0x60] sm:$0xff]
        %v1623 = vld [vmem:[#allocation15 + $0x68] sm:$0xff]
        %v1624 = vld [vmem:[#allocation15 + $0x70] sm:$0xff]
        %v1625 = vld [vmem:[#allocation15 + $0x78] sm:$0xff]
        %v1626 = vld [vmem:[#allocation15 + $0x80] sm:$0xff]
        %v1627 = vld [vmem:[#allocation15 + $0x88] sm:$0xff]
        %v1628 = vld [vmem:[#allocation15 + $0x90] sm:$0xff]
        %v1629 = vld [vmem:[#allocation15 + $0x98] sm:$0xff]
        %v1630 = vld [vmem:[#allocation15 + $0xa0] sm:$0xff]
        %v1631 = vld [vmem:[#allocation15 + $0xa8] sm:$0xff]
        %v1632 = vld [vmem:[#allocation15 + $0xb0] sm:$0xff]
        %v1633 = vld [vmem:[#allocation15 + $0xb8] sm:$0xff]
        %v1634 = vld [vmem:[#allocation15 + $0xc0] sm:$0xff]
        %v1635 = vld [vmem:[#allocation15 + $0xc8] sm:$0xff]
        %v1636 = vld [vmem:[#allocation15 + $0xd0] sm:$0xff]
        %v1637 = vld [vmem:[#allocation15 + $0xd8] sm:$0xff]
        %v1638 = vld [vmem:[#allocation15 + $0xe0] sm:$0xff]
        %v1639 = vld [vmem:[#allocation15 + $0xe8] sm:$0xff]
        %v1640 = vld [vmem:[#allocation15 + $0xf0] sm:$0xff]
        %v1641 = vld [vmem:[#allocation15 + $0xf8] sm:$0xff]
        %v1642 = vld [vmem:[%s11] sm:$0xf]
        %v1644 = vlaneseq
        %v1645 = vshrl.u32 %v1644, 7
        %v1646 = vsub.s32 0, %v1645
        %v1647 = vrot.slane %v1642, %v1646
        %v1648 = vlaneseq
        %v1649 = vshrl.u32 %v1648, 7
        %v1650 = vsub.s32 1, %v1649
        %v1651 = vrot.slane %v1642, %v1650
        %v1652 = vlaneseq
        %v1653 = vshrl.u32 %v1652, 7
        %v1654 = vsub.s32 2, %v1653
        %v1655 = vrot.slane %v1642, %v1654
        %v1656 = vlaneseq
        %v1657 = vshrl.u32 %v1656, 7
        %v1658 = vsub.s32 3, %v1657
        %v1659 = vrot.slane %v1642, %v1658
        %v1696 = vunpack.c.l.b16 %v1610
        %v1697 = vunpack.c.h.b16 %v1610
        %v1698 = vunpack.c.l.b16 %v1611
        %v1699 = vunpack.c.h.b16 %v1611
        %v1700 = vunpack.c.l.b16 %v1612
        %v1701 = vunpack.c.h.b16 %v1612
        %v1702 = vunpack.c.l.b16 %v1613
        %v1703 = vunpack.c.h.b16 %v1613
        %v1704 = vunpack.c.l.b16 %v1614
        %v1705 = vunpack.c.h.b16 %v1614
        %v1706 = vunpack.c.l.b16 %v1615
        %v1707 = vunpack.c.h.b16 %v1615
        %v1708 = vunpack.c.l.b16 %v1616
        %v1709 = vunpack.c.h.b16 %v1616
        %v1710 = vunpack.c.l.b16 %v1617
        %v1711 = vunpack.c.h.b16 %v1617
        %v1712 = vunpack.c.l.b16 %v1618
        %v1713 = vunpack.c.h.b16 %v1618
        %v1714 = vunpack.c.l.b16 %v1619
        %v1715 = vunpack.c.h.b16 %v1619
        %v1716 = vunpack.c.l.b16 %v1620
        %v1717 = vunpack.c.h.b16 %v1620
        %v1718 = vunpack.c.l.b16 %v1621
        %v1719 = vunpack.c.h.b16 %v1621
        %v1720 = vunpack.c.l.b16 %v1622
        %v1721 = vunpack.c.h.b16 %v1622
        %v1722 = vunpack.c.l.b16 %v1623
        %v1723 = vunpack.c.h.b16 %v1623
        %v1724 = vunpack.c.l.b16 %v1624
        %v1725 = vunpack.c.h.b16 %v1624
        %v1726 = vunpack.c.l.b16 %v1625
        %v1727 = vunpack.c.h.b16 %v1625
        %v1728 = vunpack.c.l.b16 %v1626
        %v1729 = vunpack.c.h.b16 %v1626
        %v1730 = vunpack.c.l.b16 %v1627
        %v1731 = vunpack.c.h.b16 %v1627
        %v1732 = vunpack.c.l.b16 %v1628
        %v1733 = vunpack.c.h.b16 %v1628
        %v1734 = vunpack.c.l.b16 %v1629
        %v1735 = vunpack.c.h.b16 %v1629
        %v1736 = vunpack.c.l.b16 %v1630
        %v1737 = vunpack.c.h.b16 %v1630
        %v1738 = vunpack.c.l.b16 %v1631
        %v1739 = vunpack.c.h.b16 %v1631
        %v1740 = vunpack.c.l.b16 %v1632
        %v1741 = vunpack.c.h.b16 %v1632
        %v1742 = vunpack.c.l.b16 %v1633
        %v1743 = vunpack.c.h.b16 %v1633
        %v1744 = vunpack.c.l.b16 %v1634
        %v1745 = vunpack.c.h.b16 %v1634
        %v1746 = vunpack.c.l.b16 %v1635
        %v1747 = vunpack.c.h.b16 %v1635
        %v1748 = vunpack.c.l.b16 %v1636
        %v1749 = vunpack.c.h.b16 %v1636
        %v1750 = vunpack.c.l.b16 %v1637
        %v1751 = vunpack.c.h.b16 %v1637
        %v1752 = vunpack.c.l.b16 %v1638
        %v1753 = vunpack.c.h.b16 %v1638
        %v1754 = vunpack.c.l.b16 %v1639
        %v1755 = vunpack.c.h.b16 %v1639
        %v1756 = vunpack.c.l.b16 %v1640
        %v1757 = vunpack.c.h.b16 %v1640
        %v1758 = vunpack.c.l.b16 %v1641
        %v1759 = vunpack.c.h.b16 %v1641
        %v1760 = vpack.c.b16 %v1700, %v1696
        %v1761 = vpack.c.b16 %v1701, %v1697
        %v1762 = vpack.c.b16 %v1702, %v1698
        %v1763 = vpack.c.b16 %v1703, %v1699
        %v1764 = vpack.c.b16 %v1708, %v1704
        %v1765 = vpack.c.b16 %v1709, %v1705
        %v1766 = vpack.c.b16 %v1710, %v1706
        %v1767 = vpack.c.b16 %v1711, %v1707
        %v1768 = vpack.c.b16 %v1716, %v1712
        %v1769 = vpack.c.b16 %v1717, %v1713
        %v1770 = vpack.c.b16 %v1718, %v1714
        %v1771 = vpack.c.b16 %v1719, %v1715
        %v1772 = vpack.c.b16 %v1724, %v1720
        %v1773 = vpack.c.b16 %v1725, %v1721
        %v1774 = vpack.c.b16 %v1726, %v1722
        %v1775 = vpack.c.b16 %v1727, %v1723
        %v1776 = vpack.c.b16 %v1732, %v1728
        %v1777 = vpack.c.b16 %v1733, %v1729
        %v1778 = vpack.c.b16 %v1734, %v1730
        %v1779 = vpack.c.b16 %v1735, %v1731
        %v1780 = vpack.c.b16 %v1740, %v1736
        %v1781 = vpack.c.b16 %v1741, %v1737
        %v1782 = vpack.c.b16 %v1742, %v1738
        %v1783 = vpack.c.b16 %v1743, %v1739
        %v1784 = vpack.c.b16 %v1748, %v1744
        %v1785 = vpack.c.b16 %v1749, %v1745
        %v1786 = vpack.c.b16 %v1750, %v1746
        %v1787 = vpack.c.b16 %v1751, %v1747
        %v1788 = vpack.c.b16 %v1756, %v1752
        %v1789 = vpack.c.b16 %v1757, %v1753
        %v1790 = vpack.c.b16 %v1758, %v1754
        %v1791 = vpack.c.b16 %v1759, %v1755
        %1824 = vmatprep.subr.bf16.mxu0 %v1789
        %1825 = vmatpush1.bf16.msra.mxu0 %v1788
        %1826 = vmatprep.subr.bf16.mxu0 %v1785
        %1827 = vmatpush1.bf16.msra.mxu0 %v1784
        %1828 = vmatprep.subr.bf16.mxu0 %v1781
        %1829 = vmatpush1.bf16.msra.mxu0 %v1780
        %1830 = vmatprep.subr.bf16.mxu0 %v1777
        %1831 = vmatpush1.bf16.msra.mxu0 %v1776
        %1832 = vmatprep.subr.bf16.mxu0 %v1773
        %1833 = vmatpush1.bf16.msra.mxu0 %v1772
        %1834 = vmatprep.subr.bf16.mxu0 %v1769
        %1835 = vmatpush1.bf16.msra.mxu0 %v1768
        %1836 = vmatprep.subr.bf16.mxu0 %v1765
        %1837 = vmatpush1.bf16.msra.mxu0 %v1764
        %1838 = vmatprep.subr.bf16.mxu0 %v1761
        %1839 = vmatpush1.bf16.msra.mxu0 %v1760
        %1840 = vmatprep.subr.bf16.mxu0 0
        %1841 = vmatpush2.bf16.msra.mxu0 0
        %1842 = vmatprep.subr.bf16.mxu0 0
        %1843 = vmatpush2.bf16.msra.mxu0 0
        %1844 = vmatprep.subr.bf16.mxu0 0
        %1845 = vmatpush2.bf16.msra.mxu0 0
        %1846 = vmatprep.subr.bf16.mxu0 0
        %1847 = vmatpush2.bf16.msra.mxu0 0
        %1848 = vmatprep.subr.bf16.mxu0 0
        %1849 = vmatpush2.bf16.msra.mxu0 0
        %1850 = vmatprep.subr.bf16.mxu0 0
        %1851 = vmatpush2.bf16.msra.mxu0 0
        %1852 = vmatprep.subr.bf16.mxu0 0
        %1853 = vmatpush2.bf16.msra.mxu0 0
        %1854 = vmatprep.subr.bf16.mxu0 0
        %1855 = vmatpush2.bf16.msra.mxu0 0
        %1856 = vmatprep.mubr.bf16.mxu0 0
        %1857 = vmatmul.mubr.bf16.gmra.mxu0 %v1609
        %v1858 = vpop.f32.mrf.mxu0
        %v1859 = vadd.f32 %v1647, %v1858
        %v1860 = vpop.f32.mrf.mxu0
        %v1861 = vadd.f32 %v1651, %v1860
        %v1862 = vpop.f32.mrf.mxu0
        %v1863 = vadd.f32 %v1647, %v1862
        %v1864 = vpop.f32.mrf.mxu0
        %v1865 = vadd.f32 %v1651, %v1864
        %1866 = vdwg.mxu0
        %1867 = vmatprep.subr.bf16.mxu0 %v1791
        %1868 = vmatpush1.bf16.msra.mxu0 %v1790
        %1869 = vmatprep.subr.bf16.mxu0 %v1787
        %1870 = vmatpush1.bf16.msra.mxu0 %v1786
        %1871 = vmatprep.subr.bf16.mxu0 %v1783
        %1872 = vmatpush1.bf16.msra.mxu0 %v1782
        %1873 = vmatprep.subr.bf16.mxu0 %v1779
        %1874 = vmatpush1.bf16.msra.mxu0 %v1778
        %1875 = vmatprep.subr.bf16.mxu0 %v1775
        %1876 = vmatpush1.bf16.msra.mxu0 %v1774
        %1877 = vmatprep.subr.bf16.mxu0 %v1771
        %1878 = vmatpush1.bf16.msra.mxu0 %v1770
        %1879 = vmatprep.subr.bf16.mxu0 %v1767
        %1880 = vmatpush1.bf16.msra.mxu0 %v1766
        %1881 = vmatprep.subr.bf16.mxu0 %v1763
        %1882 = vmatpush1.bf16.msra.mxu0 %v1762
        %1883 = vmatprep.subr.bf16.mxu0 0
        %1884 = vmatpush2.bf16.msra.mxu0 0
        %1885 = vmatprep.subr.bf16.mxu0 0
        %1886 = vmatpush2.bf16.msra.mxu0 0
        %1887 = vmatprep.subr.bf16.mxu0 0
        %1888 = vmatpush2.bf16.msra.mxu0 0
        %1889 = vmatprep.subr.bf16.mxu0 0
        %1890 = vmatpush2.bf16.msra.mxu0 0
        %1891 = vmatprep.subr.bf16.mxu0 0
        %1892 = vmatpush2.bf16.msra.mxu0 0
        %1893 = vmatprep.subr.bf16.mxu0 0
        %1894 = vmatpush2.bf16.msra.mxu0 0
        %1895 = vmatprep.subr.bf16.mxu0 0
        %1896 = vmatpush2.bf16.msra.mxu0 0
        %1897 = vmatprep.subr.bf16.mxu0 0
        %1898 = vmatpush2.bf16.msra.mxu0 0
        %1899 = vmatprep.mubr.bf16.mxu0 0
        %1900 = vmatmul.mubr.bf16.gmra.mxu0 %v1609
        %v1901 = vpop.f32.mrf.mxu0
        %v1902 = vadd.f32 %v1655, %v1901
        %v1903 = vpop.f32.mrf.mxu0
        %v1904 = vadd.f32 %v1659, %v1903
        %v1905 = vpop.f32.mrf.mxu0
        %v1906 = vadd.f32 %v1655, %v1905
        %v1907 = vpop.f32.mrf.mxu0
        %v1908 = vadd.f32 %v1659, %v1907
        %1909 = vdwg.mxu0
        %v1910 = vmul.f32 %v1859, 0.5
        %v1911 = vmul.f32 %v1861, 0.5
        %v1912 = vmul.f32 %v1902, 0.5
        %v1913 = vmul.f32 %v1904, 0.5
        %v1914 = vmul.f32 %v1863, 0.5
        %v1915 = vmul.f32 %v1865, 0.5
        %v1916 = vmul.f32 %v1906, 0.5
        %v1917 = vmul.f32 %v1908, 0.5
        %v1918 = vmul.f32 %v1859, 0.70710677
        %v1919 = vmul.f32 %v1861, 0.70710677
        %v1920 = vmul.f32 %v1902, 0.70710677
        %v1921 = vmul.f32 %v1904, 0.70710677
        %v1922 = vmul.f32 %v1863, 0.70710677
        %v1923 = vmul.f32 %v1865, 0.70710677
        %v1924 = vmul.f32 %v1906, 0.70710677
        %v1925 = vmul.f32 %v1908, 0.70710677
        %v1926 = verf.f32.pop %v1918
        %v1927 = verf.f32.pop %v1919
        %v1928 = verf.f32.pop %v1920
        %v1929 = verf.f32.pop %v1921
        %v1930 = verf.f32.pop %v1922
        %v1931 = verf.f32.pop %v1923
        %v1932 = verf.f32.pop %v1924
        %v1933 = verf.f32.pop %v1925
        %v1934 = vadd.f32 %v1926, 1.0
        %v1935 = vadd.f32 %v1927, 1.0
        %v1936 = vadd.f32 %v1928, 1.0
        %v1937 = vadd.f32 %v1929, 1.0
        %v1938 = vadd.f32 %v1930, 1.0
        %v1939 = vadd.f32 %v1931, 1.0
        %v1940 = vadd.f32 %v1932, 1.0
        %v1941 = vadd.f32 %v1933, 1.0
        %v1942 = vmul.f32 %v1910, %v1934
        %v1943 = vmul.f32 %v1911, %v1935
        %v1944 = vmul.f32 %v1912, %v1936
        %v1945 = vmul.f32 %v1913, %v1937
        %v1946 = vmul.f32 %v1914, %v1938
        %v1947 = vmul.f32 %v1915, %v1939
        %v1948 = vmul.f32 %v1916, %v1940
        %v1949 = vmul.f32 %v1917, %v1941
        %v1950 = vpack.c.bf16 %v1946, %v1942
        %v1951 = vpack.c.bf16 %v1947, %v1943
        %v1952 = vpack.c.bf16 %v1948, %v1944
        %v1953 = vpack.c.bf16 %v1949, %v1945
        %v1954 = vld [vmem:[#allocation17] sm:$0xf]
        %v1955 = vld [vmem:[#allocation17 + $0x4] sm:$0xf]
        %v1956 = vld [vmem:[#allocation17 + $0x8] sm:$0xf]
        %v1957 = vld [vmem:[#allocation17 + $0xc] sm:$0xf]
        %v1958 = vld [vmem:[#allocation17 + $0x10] sm:$0xf]
        %v1959 = vld [vmem:[#allocation17 + $0x14] sm:$0xf]
        %v1960 = vld [vmem:[#allocation17 + $0x18] sm:$0xf]
        %v1961 = vld [vmem:[#allocation17 + $0x1c] sm:$0xf]
        %v1962 = vld [vmem:[#allocation17 + $0x20] sm:$0xf]
        %v1963 = vld [vmem:[#allocation17 + $0x24] sm:$0xf]
        %v1964 = vld [vmem:[#allocation17 + $0x28] sm:$0xf]
        %v1965 = vld [vmem:[#allocation17 + $0x2c] sm:$0xf]
        %v1966 = vld [vmem:[#allocation17 + $0x30] sm:$0xf]
        %v1967 = vld [vmem:[#allocation17 + $0x34] sm:$0xf]
        %v1968 = vld [vmem:[#allocation17 + $0x38] sm:$0xf]
        %v1969 = vld [vmem:[#allocation17 + $0x3c] sm:$0xf]
        %v1970 = vld [vmem:[#allocation17 + $0x40] sm:$0xf]
        %v1971 = vld [vmem:[#allocation17 + $0x44] sm:$0xf]
        %v1972 = vld [vmem:[#allocation17 + $0x48] sm:$0xf]
        %v1973 = vld [vmem:[#allocation17 + $0x4c] sm:$0xf]
        %v1974 = vld [vmem:[#allocation17 + $0x50] sm:$0xf]
        %v1975 = vld [vmem:[#allocation17 + $0x54] sm:$0xf]
        %v1976 = vld [vmem:[#allocation17 + $0x58] sm:$0xf]
        %v1977 = vld [vmem:[#allocation17 + $0x5c] sm:$0xf]
        %v1978 = vld [vmem:[#allocation17 + $0x60] sm:$0xf]
        %v1979 = vld [vmem:[#allocation17 + $0x64] sm:$0xf]
        %v1980 = vld [vmem:[#allocation17 + $0x68] sm:$0xf]
        %v1981 = vld [vmem:[#allocation17 + $0x6c] sm:$0xf]
        %v1982 = vld [vmem:[#allocation17 + $0x70] sm:$0xf]
        %v1983 = vld [vmem:[#allocation17 + $0x74] sm:$0xf]
        %v1984 = vld [vmem:[#allocation17 + $0x78] sm:$0xf]
        %v1985 = vld [vmem:[#allocation17 + $0x7c] sm:$0xf]
        %v1986 = vld [vmem:[#allocation17 + $0x80] sm:$0xf]
        %v1987 = vld [vmem:[#allocation17 + $0x84] sm:$0xf]
        %v1988 = vld [vmem:[#allocation17 + $0x88] sm:$0xf]
        %v1989 = vld [vmem:[#allocation17 + $0x8c] sm:$0xf]
        %v1990 = vld [vmem:[#allocation17 + $0x90] sm:$0xf]
        %v1991 = vld [vmem:[#allocation17 + $0x94] sm:$0xf]
        %v1992 = vld [vmem:[#allocation17 + $0x98] sm:$0xf]
        %v1993 = vld [vmem:[#allocation17 + $0x9c] sm:$0xf]
        %v1994 = vld [vmem:[#allocation17 + $0xa0] sm:$0xf]
        %v1995 = vld [vmem:[#allocation17 + $0xa4] sm:$0xf]
        %v1996 = vld [vmem:[#allocation17 + $0xa8] sm:$0xf]
        %v1997 = vld [vmem:[#allocation17 + $0xac] sm:$0xf]
        %v1998 = vld [vmem:[#allocation17 + $0xb0] sm:$0xf]
        %v1999 = vld [vmem:[#allocation17 + $0xb4] sm:$0xf]
        %v2000 = vld [vmem:[#allocation17 + $0xb8] sm:$0xf]
        %v2001 = vld [vmem:[#allocation17 + $0xbc] sm:$0xf]
        %v2002 = vld [vmem:[#allocation17 + $0xc0] sm:$0xf]
        %v2003 = vld [vmem:[#allocation17 + $0xc4] sm:$0xf]
        %v2004 = vld [vmem:[#allocation17 + $0xc8] sm:$0xf]
        %v2005 = vld [vmem:[#allocation17 + $0xcc] sm:$0xf]
        %v2006 = vld [vmem:[#allocation17 + $0xd0] sm:$0xf]
        %v2007 = vld [vmem:[#allocation17 + $0xd4] sm:$0xf]
        %v2008 = vld [vmem:[#allocation17 + $0xd8] sm:$0xf]
        %v2009 = vld [vmem:[#allocation17 + $0xdc] sm:$0xf]
        %v2010 = vld [vmem:[#allocation17 + $0xe0] sm:$0xf]
        %v2011 = vld [vmem:[#allocation17 + $0xe4] sm:$0xf]
        %v2012 = vld [vmem:[#allocation17 + $0xe8] sm:$0xf]
        %v2013 = vld [vmem:[#allocation17 + $0xec] sm:$0xf]
        %v2014 = vld [vmem:[#allocation17 + $0xf0] sm:$0xf]
        %v2015 = vld [vmem:[#allocation17 + $0xf4] sm:$0xf]
        %v2016 = vld [vmem:[#allocation17 + $0xf8] sm:$0xf]
        %v2017 = vld [vmem:[#allocation17 + $0xfc] sm:$0xf]
        %v2018 = vld [vmem:[%s13] sm:$0x1]
        %v2020 = vlaneseq
        %v2021 = vshrl.u32 %v2020, 7
        %v2022 = vsub.s32 0, %v2021
        %v2023 = vrot.slane %v2018, %v2022
        %v2089 = vunpack.c.l.b16 %v1954
        %v2090 = vunpack.c.l.b16 %v1955
        %v2091 = vunpack.c.l.b16 %v1956
        %v2092 = vunpack.c.l.b16 %v1957
        %v2093 = vunpack.c.l.b16 %v1958
        %v2094 = vunpack.c.l.b16 %v1959
        %v2095 = vunpack.c.l.b16 %v1960
        %v2096 = vunpack.c.l.b16 %v1961
        %v2097 = vunpack.c.l.b16 %v1962
        %v2098 = vunpack.c.l.b16 %v1963
        %v2099 = vunpack.c.l.b16 %v1964
        %v2100 = vunpack.c.l.b16 %v1965
        %v2101 = vunpack.c.l.b16 %v1966
        %v2102 = vunpack.c.l.b16 %v1967
        %v2103 = vunpack.c.l.b16 %v1968
        %v2104 = vunpack.c.l.b16 %v1969
        %v2105 = vunpack.c.l.b16 %v1970
        %v2106 = vunpack.c.l.b16 %v1971
        %v2107 = vunpack.c.l.b16 %v1972
        %v2108 = vunpack.c.l.b16 %v1973
        %v2109 = vunpack.c.l.b16 %v1974
        %v2110 = vunpack.c.l.b16 %v1975
        %v2111 = vunpack.c.l.b16 %v1976
        %v2112 = vunpack.c.l.b16 %v1977
        %v2113 = vunpack.c.l.b16 %v1978
        %v2114 = vunpack.c.l.b16 %v1979
        %v2115 = vunpack.c.l.b16 %v1980
        %v2116 = vunpack.c.l.b16 %v1981
        %v2117 = vunpack.c.l.b16 %v1982
        %v2118 = vunpack.c.l.b16 %v1983
        %v2119 = vunpack.c.l.b16 %v1984
        %v2120 = vunpack.c.l.b16 %v1985
        %v2121 = vunpack.c.l.b16 %v1986
        %v2122 = vunpack.c.l.b16 %v1987
        %v2123 = vunpack.c.l.b16 %v1988
        %v2124 = vunpack.c.l.b16 %v1989
        %v2125 = vunpack.c.l.b16 %v1990
        %v2126 = vunpack.c.l.b16 %v1991
        %v2127 = vunpack.c.l.b16 %v1992
        %v2128 = vunpack.c.l.b16 %v1993
        %v2129 = vunpack.c.l.b16 %v1994
        %v2130 = vunpack.c.l.b16 %v1995
        %v2131 = vunpack.c.l.b16 %v1996
        %v2132 = vunpack.c.l.b16 %v1997
        %v2133 = vunpack.c.l.b16 %v1998
        %v2134 = vunpack.c.l.b16 %v1999
        %v2135 = vunpack.c.l.b16 %v2000
        %v2136 = vunpack.c.l.b16 %v2001
        %v2137 = vunpack.c.l.b16 %v2002
        %v2138 = vunpack.c.l.b16 %v2003
        %v2139 = vunpack.c.l.b16 %v2004
        %v2140 = vunpack.c.l.b16 %v2005
        %v2141 = vunpack.c.l.b16 %v2006
        %v2142 = vunpack.c.l.b16 %v2007
        %v2143 = vunpack.c.l.b16 %v2008
        %v2144 = vunpack.c.l.b16 %v2009
        %v2145 = vunpack.c.l.b16 %v2010
        %v2146 = vunpack.c.l.b16 %v2011
        %v2147 = vunpack.c.l.b16 %v2012
        %v2148 = vunpack.c.l.b16 %v2013
        %v2149 = vunpack.c.l.b16 %v2014
        %v2150 = vunpack.c.l.b16 %v2015
        %v2151 = vunpack.c.l.b16 %v2016
        %v2152 = vunpack.c.l.b16 %v2017
        %v2153 = vpack.c.b16 %v2090, %v2089
        %v2154 = vpack.c.b16 %v2092, %v2091
        %v2155 = vpack.c.b16 %v2094, %v2093
        %v2156 = vpack.c.b16 %v2096, %v2095
        %v2157 = vpack.c.b16 %v2098, %v2097
        %v2158 = vpack.c.b16 %v2100, %v2099
        %v2159 = vpack.c.b16 %v2102, %v2101
        %v2160 = vpack.c.b16 %v2104, %v2103
        %v2161 = vpack.c.b16 %v2106, %v2105
        %v2162 = vpack.c.b16 %v2108, %v2107
        %v2163 = vpack.c.b16 %v2110, %v2109
        %v2164 = vpack.c.b16 %v2112, %v2111
        %v2165 = vpack.c.b16 %v2114, %v2113
        %v2166 = vpack.c.b16 %v2116, %v2115
        %v2167 = vpack.c.b16 %v2118, %v2117
        %v2168 = vpack.c.b16 %v2120, %v2119
        %v2169 = vpack.c.b16 %v2122, %v2121
        %v2170 = vpack.c.b16 %v2124, %v2123
        %v2171 = vpack.c.b16 %v2126, %v2125
        %v2172 = vpack.c.b16 %v2128, %v2127
        %v2173 = vpack.c.b16 %v2130, %v2129
        %v2174 = vpack.c.b16 %v2132, %v2131
        %v2175 = vpack.c.b16 %v2134, %v2133
        %v2176 = vpack.c.b16 %v2136, %v2135
        %v2177 = vpack.c.b16 %v2138, %v2137
        %v2178 = vpack.c.b16 %v2140, %v2139
        %v2179 = vpack.c.b16 %v2142, %v2141
        %v2180 = vpack.c.b16 %v2144, %v2143
        %v2181 = vpack.c.b16 %v2146, %v2145
        %v2182 = vpack.c.b16 %v2148, %v2147
        %v2183 = vpack.c.b16 %v2150, %v2149
        %v2184 = vpack.c.b16 %v2152, %v2151
        %2217 = vmatprep.subr.bf16.mxu0 0
        %2218 = vmatpush1.bf16.msra.mxu0 %v2160
        %2219 = vmatprep.subr.bf16.mxu0 0
        %2220 = vmatpush1.bf16.msra.mxu0 %v2159
        %2221 = vmatprep.subr.bf16.mxu0 0
        %2222 = vmatpush1.bf16.msra.mxu0 %v2158
        %2223 = vmatprep.subr.bf16.mxu0 0
        %2224 = vmatpush1.bf16.msra.mxu0 %v2157
        %2225 = vmatprep.subr.bf16.mxu0 0
        %2226 = vmatpush1.bf16.msra.mxu0 %v2156
        %2227 = vmatprep.subr.bf16.mxu0 0
        %2228 = vmatpush1.bf16.msra.mxu0 %v2155
        %2229 = vmatprep.subr.bf16.mxu0 0
        %2230 = vmatpush1.bf16.msra.mxu0 %v2154
        %2231 = vmatprep.subr.bf16.mxu0 0
        %2232 = vmatpush1.bf16.msra.mxu0 %v2153
        %2233 = vmatprep.subr.bf16.mxu0 0
        %2234 = vmatpush2.bf16.msra.mxu0 %v2168
        %2235 = vmatprep.subr.bf16.mxu0 0
        %2236 = vmatpush2.bf16.msra.mxu0 %v2167
        %2237 = vmatprep.subr.bf16.mxu0 0
        %2238 = vmatpush2.bf16.msra.mxu0 %v2166
        %2239 = vmatprep.subr.bf16.mxu0 0
        %2240 = vmatpush2.bf16.msra.mxu0 %v2165
        %2241 = vmatprep.subr.bf16.mxu0 0
        %2242 = vmatpush2.bf16.msra.mxu0 %v2164
        %2243 = vmatprep.subr.bf16.mxu0 0
        %2244 = vmatpush2.bf16.msra.mxu0 %v2163
        %2245 = vmatprep.subr.bf16.mxu0 0
        %2246 = vmatpush2.bf16.msra.mxu0 %v2162
        %2247 = vmatprep.subr.bf16.mxu0 0
        %2248 = vmatpush2.bf16.msra.mxu0 %v2161
        %2249 = vmatprep.mubr.bf16.mxu0 %v1951
        %2250 = vmatmul.mubr.bf16.gmra.mxu0 %v1950
        %v2251 = vpop.f32.mrf.mxu0
        %v2252 = vadd.f32 %v2023, %v2251
        %v2253 = vpop.f32.mrf.mxu0
        %v2254 = vpop.f32.mrf.mxu0
        %v2255 = vadd.f32 %v2023, %v2254
        %v2256 = vpop.f32.mrf.mxu0
        %2257 = vdwg.mxu0
        %2258 = vmatprep.subr.bf16.mxu0 0
        %2259 = vmatpush1.bf16.msra.mxu0 %v2176
        %2260 = vmatprep.subr.bf16.mxu0 0
        %2261 = vmatpush1.bf16.msra.mxu0 %v2175
        %2262 = vmatprep.subr.bf16.mxu0 0
        %2263 = vmatpush1.bf16.msra.mxu0 %v2174
        %2264 = vmatprep.subr.bf16.mxu0 0
        %2265 = vmatpush1.bf16.msra.mxu0 %v2173
        %2266 = vmatprep.subr.bf16.mxu0 0
        %2267 = vmatpush1.bf16.msra.mxu0 %v2172
        %2268 = vmatprep.subr.bf16.mxu0 0
        %2269 = vmatpush1.bf16.msra.mxu0 %v2171
        %2270 = vmatprep.subr.bf16.mxu0 0
        %2271 = vmatpush1.bf16.msra.mxu0 %v2170
        %2272 = vmatprep.subr.bf16.mxu0 0
        %2273 = vmatpush1.bf16.msra.mxu0 %v2169
        %2274 = vmatprep.subr.bf16.mxu0 0
        %2275 = vmatpush2.bf16.msra.mxu0 %v2184
        %2276 = vmatprep.subr.bf16.mxu0 0
        %2277 = vmatpush2.bf16.msra.mxu0 %v2183
        %2278 = vmatprep.subr.bf16.mxu0 0
        %2279 = vmatpush2.bf16.msra.mxu0 %v2182
        %2280 = vmatprep.subr.bf16.mxu0 0
        %2281 = vmatpush2.bf16.msra.mxu0 %v2181
        %2282 = vmatprep.subr.bf16.mxu0 0
        %2283 = vmatpush2.bf16.msra.mxu0 %v2180
        %2284 = vmatprep.subr.bf16.mxu0 0
        %2285 = vmatpush2.bf16.msra.mxu0 %v2179
        %2286 = vmatprep.subr.bf16.mxu0 0
        %2287 = vmatpush2.bf16.msra.mxu0 %v2178
        %2288 = vmatprep.subr.bf16.mxu0 0
        %2289 = vmatpush2.bf16.msra.mxu0 %v2177
        %2290 = vmatprep.mubr.bf16.mxu0 %v1953
        %2291 = vmatmul.mubr.bf16.gmra.mxu0 %v1952
        %v2292 = vpop.f32.mrf.mxu0
        %v2293 = vadd.f32 %v2252, %v2292
        %v2294 = vpop.f32.mrf.mxu0
        %v2295 = vpop.f32.mrf.mxu0
        %v2296 = vadd.f32 %v2255, %v2295
        %v2297 = vpop.f32.mrf.mxu0
        %2298 = vdwg.mxu0
        %v2299 = vadd.f32 %v1567, %v2293
        %v2300 = vadd.f32 %v1568, %v2296
        %2301 = vst [vmem:[%s595] sm:$0xff] %v2299
        %2302 = vst [vmem:[%s595 + $0x8] sm:$0xff] %v2300
        %s2303 = sand.u32 %s342, 1
        %s2304 = scalar_lea.sflag [#allocation5], %s2303
        %s2305 = sand.u32 %s342, 1
        %s2306 = smul.addr %s2305, 16
        %s2307 = scalar_lea.vmem [#allocation18], %s2306
        // Predicated region
        $region113: #{tpu_custom_call.1} parent=75 // pred_check
          %p2308 = pneg %p352
        $region114: #{tpu_custom_call.1} parent=75 // pred_check_branch
          %2310 = sbr.rel (%p2308) target = $region116
        $region115: #{tpu_custom_call.1} parent=75 // pred_region
          %s2312 = ssub.s32 256, 256
          %2313 = vsyncadd %s2304, %s2312
          %s2314 = smul.addr %s35, 2
          %s2315 = smul.addr %s2314, 128
          %s2316 = scalar_lea.hbm %s14, %s2315
          %s2317 = sshll.u32 %s2307, 4
          %s2318 = int_to_ptr.vmem [resolvable:$true] %s2317
          %2323 = dma.vmem_to_hbm [thread:$0]  %s2318, 256, %s2316, %s2304, 128, 128, 8
        $region116: #{tpu_custom_call.1} parent=75 // pred_fallthru
          _
      $region76: #{tpu_custom_call.1} parent=5 // pred_fallthru
        _
      %p2324 = scmp.le.s32.totalorder 2, %s30
      // Predicated region
      $region117: #{tpu_custom_call.1} parent=5 // pred_check
        %p2325 = pneg %p2324
      $region118: #{tpu_custom_call.1} parent=5 // pred_check_branch
        %2327 = sbr.rel (%p2325) target = $region120
      $region119: #{tpu_custom_call.1} parent=5 // pred_region
        %s2328 = ssub.s32 %s30, 2
        // Predicated region
        $region121: #{tpu_custom_call.1} parent=119 // pred_check
          %p2329 = pneg %p358
        $region122: #{tpu_custom_call.1} parent=119 // pred_check_branch
          %2331 = sbr.rel (%p2329) target = $region124
        $region123: #{tpu_custom_call.1} parent=119 // pred_region
          %s2332 = sand.u32 %s343, 1
          %s2333 = scalar_lea.sflag [#allocation5], %s2332
          %s2334 = sand.u32 %s343, 1
          %s2335 = smul.addr %s2334, 16
          %s2336 = scalar_lea.vmem [#allocation18], %s2335
          %2337 = dma.done %s2333, 256
        $region124: #{tpu_custom_call.1} parent=119 // pred_fallthru
          _
      $region120: #{tpu_custom_call.1} parent=5 // pred_fallthru
        _
    $region6: #{tpu_custom_call.1} parent=1 // loop_footer
      %s34 = sadd.s32 1, %s30
    $region7: #{tpu_custom_call.1} parent=1 // loop_footer_branch
      %29 = sbr.rel target = $region3
    $region8: #{tpu_custom_call.1} parent=1 // loop_exit
      _
    %2338 = vsyncpa [#allocation4], 1
    %s2339 = scalar_lea.sflag [#allocation4], 1
    %2340 = vsyncpa %s2339, 1
    %2341 = vsyncpa [#allocation7], 1
    %2342 = vsyncpa [#allocation10], 1
    %2343 = vsyncpa [#allocation13], 1
    %2344 = vsyncpa [#allocation16], 1
    %2345 = vsyncpa [#allocation5], 1
    %s2346 = scalar_lea.sflag [#allocation5], 1
    %2347 = vsyncpa %s2346, 1

</llo_original>
